<compile_context>
chip_gen: v5e
topology: v5e:2x2
jax: 0.10.0
libtpu: 0.0.40
codegen_flags: <defaults>
</compile_context>

<pallas_src>
import functools

import jax
import jax.numpy as jnp
from jax.experimental import pallas as pl
from jax.experimental.pallas import tpu as pltpu


def _preproc_kernel(x_ref, bma_ref, bmv_ref, o_ref, *,
                    inv_k_ma, inv_sqrt_k_mv, inv_L, inv_nm1):
    x = x_ref[...].astype(jnp.float32)                        # (TM, L)

    # ---- step 1: standardize over the sequence axis (unbiased std + 1e-5).
    mean = jnp.sum(x, axis=-1, keepdims=True) * inv_L
    c = x - mean
    var = jnp.sum(c * c, axis=-1, keepdims=True) * inv_nm1    # 1/(L-1)
    inv_std = 1.0 / (jnp.sqrt(var) + 1e-5)                    # (TM, 1)
    x1 = c * inv_std

    # ---- step 2: subtract zero-padded moving average.
    # Exact 0/1 bf16 band on the MXU, f32 accumulation; 1/k_ma applied as a
    # single f32 VPU scale on the result.
    ma = jnp.dot(x1.astype(jnp.bfloat16), bma_ref[...],
                 preferred_element_type=jnp.float32)
    x2 = x1 - ma * inv_k_ma

    # ---- step 3: divide by zero-padded moving RMS.
    # 1/k_mv folded into the sqrt: sqrt(sum/k) = sqrt(sum) * (1/sqrt(k)).
    mv = jnp.dot((x2 * x2).astype(jnp.bfloat16), bmv_ref[...],
                 preferred_element_type=jnp.float32)
    rms = jnp.sqrt(mv) * inv_sqrt_k_mv
    o_ref[...] = (x2 / (rms + 1e-5)).astype(o_ref.dtype)


def _round_up(a, b):
    return ((a + b - 1) // b) * b


def _choose_tile(M, tile_m):
    """Pick tm minimizing padded rows: tm = round_up(cdiv(M, n_tiles), 8)."""
    tile_m = max(8, _round_up(int(tile_m), 8))
    n_tiles = -(-M // tile_m)                 # cdiv(M, tile_m)
    tm = _round_up(-(-M // n_tiles), 8)       # cdiv(M, n_tiles), sublane-aligned
    return tm, n_tiles * tm


def preprocessor_forward(x, ma_window_size=2, mv_window_size=4,
                         num_samples_per_second=125, tile_m=512):
    """x: (N, C, L) float array -> (N, C, L), same dtype."""
    N, C, L = x.shape
    k_ma = ma_window_size * num_samples_per_second + 1    # odd kernel size
    k_mv = mv_window_size * num_samples_per_second + 1    # odd kernel size
    p_ma = (k_ma - 1) // 2
    p_mv = (k_mv - 1) // 2

    M = N * C
    xm = x.reshape(M, L)

    tm, m_pad = _choose_tile(M, tile_m)
    if m_pad != M:
        # zero rows standardize to zeros and stay zero; sliced off below.
        xm = jnp.pad(xm, ((0, m_pad - M), (0, 0)))

    # Banded 0/1 matrices (exact in bf16).  (x @ band) gives the zero-padded
    # window SUM; the 1/k scaling is applied in f32 inside the kernel.
    idx = jnp.arange(L, dtype=jnp.int32)
    d = idx[:, None] - idx[None, :]
    band_ma = (jnp.abs(d) <= p_ma).astype(jnp.bfloat16)
    band_mv = (jnp.abs(d) <= p_mv).astype(jnp.bfloat16)

    kernel = functools.partial(
        _preproc_kernel,
        inv_k_ma=1.0 / k_ma,
        inv_sqrt_k_mv=1.0 / float(k_mv) ** 0.5,
        inv_L=1.0 / L,
        inv_nm1=1.0 / max(L - 1, 1))

    itemsize = jnp.dtype(x.dtype).itemsize
    band_bytes = 2 * L * L * 2                       # two bf16 bands
    vmem_bytes = (2 * band_bytes                     # bands + buffering slack
                  + 4 * tm * L * itemsize            # double-buffered input
                  + 4 * tm * L * itemsize            # double-buffered output
                  + 8 * tm * L * 4                   # f32 temporaries
                  + (4 << 20))                       # headroom
    vmem_limit = int(min(100 << 20, max(32 << 20, vmem_bytes)))

    out = pl.pallas_call(
        kernel,
        out_shape=jax.ShapeDtypeStruct((m_pad, L), x.dtype),
        grid_spec=pltpu.PrefetchScalarGridSpec(
            num_scalar_prefetch=0,
            grid=(m_pad // tm,),
            in_specs=[pl.BlockSpec((tm, L), lambda i: (i, 0)),
                      pl.BlockSpec((L, L), lambda i: (0, 0)),   # resident band
                      pl.BlockSpec((L, L), lambda i: (0, 0))],  # resident band
            out_specs=pl.BlockSpec((tm, L), lambda i: (i, 0)),
        ),
        compiler_params=pltpu.CompilerParams(
            # No cross-step scratch dependency -> safe to shard across
            # TensorCores (v7x megacore).
            dimension_semantics=("parallel",),
            vmem_limit_bytes=vmem_limit),
        cost_estimate=pl.CostEstimate(
            flops=4 * m_pad * L * L,
            transcendentals=2 * m_pad * L,
            bytes_accessed=2 * m_pad * L * itemsize + band_bytes),
    )(xm, band_ma, band_mv)

    if m_pad != M:
        out = out[:M]
    return out.reshape(N, C, L)


def _reference_forward(x, ma_window_size=2, mv_window_size=4,
                       num_samples_per_second=125):
    """Pure-JAX reference mirroring the PyTorch module (independent algorithm)."""
    k_ma = ma_window_size * num_samples_per_second + 1
    k_mv = mv_window_size * num_samples_per_second + 1
    p_ma = (k_ma - 1) // 2
    p_mv = (k_mv - 1) // 2

    def movavg(a, k, p):
        L = a.shape[-1]
        pad = jnp.pad(a, ((0, 0), (0, 0), (p, p)))
        cs = jnp.concatenate(
            [jnp.zeros(pad.shape[:-1] + (1,), pad.dtype),
             jnp.cumsum(pad, axis=-1)], axis=-1)
        return (cs[..., k:k + L] - cs[..., :L]) / k

    mean = jnp.mean(x, axis=2, keepdims=True)
    std = jnp.std(x, axis=2, keepdims=True, ddof=1)
    x = (x - mean) / (std + 1e-5)
    x = x - movavg(x, k_ma, p_ma)
    x = x / (jnp.sqrt(movavg(x * x, k_mv, p_mv)) + 1e-5)
    return x


if __name__ == "__main__":
    key = jax.random.PRNGKey(0)

    # Case 1: baseline-like shapes (single grid step).
    N, C, L = 2, 4, 512
    x = jax.random.normal(key, (N, C, L), dtype=jnp.float32) * 3.0 + 1.5
    out = jax.block_until_ready(preprocessor_forward(x))
    ref = _reference_forward(x)
    assert out.shape == (N, C, L)
    # tolerance covers the bf16 matmul operands (error averages out over the
    # >=251-sample pooling windows; typical deviation is a few 1e-4)
    assert jnp.allclose(out, ref, atol=5e-3, rtol=5e-3), "mismatch vs reference (case 1)"

    # Case 2: multi-step grid + M padding (exercises pipelining + parallel axis).
    N2, C2 = 5, 3                      # M = 15 -> padded to 16, grid = (2,)
    x2 = jax.random.normal(jax.random.PRNGKey(0), (N2, C2, L),
                           dtype=jnp.float32) * 2.0 - 0.5
    out2 = jax.block_until_ready(preprocessor_forward(x2, tile_m=8))
    ref2 = _reference_forward(x2)
    assert jnp.allclose(out2, ref2, atol=5e-3, rtol=5e-3), "mismatch vs reference (case 2)"

    print("KERNEL_OK")
</pallas_src>

<mosaic_0001>
module attributes {stable_mosaic.version = 11 : i64} {
  func.func @_preproc_kernel(%arg0: i32, %arg1: memref<8x512xf32, #tpu.memory_space<vmem>>, %arg2: memref<512x512xbf16, #tpu.memory_space<vmem>>, %arg3: memref<512x512xbf16, #tpu.memory_space<vmem>>, %arg4: memref<8x512xf32, #tpu.memory_space<vmem>>) attributes {dimension_semantics = [#tpu.dimension_semantics<parallel>], iteration_bounds = array<i64: 1>, scalar_prefetch = 0 : i64, scratch_operands = 0 : i64, tpu.core_type = #tpu.core_type<tc>, window_params = [{transform_indices = @transform_0, window_bounds = array<i64: 8, 512>}, {pipeline_mode = #tpu.pipeline_mode<synchronous>, transform_indices = @transform_1, window_bounds = array<i64: 512, 512>}, {pipeline_mode = #tpu.pipeline_mode<synchronous>, transform_indices = @transform_2, window_bounds = array<i64: 512, 512>}, {transform_indices = @transform_3, window_bounds = array<i64: 8, 512>}]} {
    %c0 = arith.constant 0 : index
    %c0_0 = arith.constant 0 : index
    %0 = vector.load %arg1[%c0, %c0_0] : memref<8x512xf32, #tpu.memory_space<vmem>>, vector<8x512xf32>
    %cst = arith.constant dense<0.000000e+00> : vector<8xf32>
    %1 = vector.multi_reduction <add>, %0, %cst [1] : vector<8x512xf32> to vector<8xf32>
    %2 = vector.shape_cast %1 : vector<8xf32> to vector<8x1xf32>
    %cst_1 = arith.constant 0.001953125 : f32
    %3 = vector.broadcast %cst_1 : f32 to vector<8x1xf32>
    %4 = arith.mulf %2, %3 : vector<8x1xf32>
    %5 = vector.broadcast %4 : vector<8x1xf32> to vector<8x512xf32>
    %6 = arith.subf %0, %5 : vector<8x512xf32>
    %7 = arith.mulf %6, %6 : vector<8x512xf32>
    %cst_2 = arith.constant dense<0.000000e+00> : vector<8xf32>
    %8 = vector.multi_reduction <add>, %7, %cst_2 [1] : vector<8x512xf32> to vector<8xf32>
    %9 = vector.shape_cast %8 : vector<8xf32> to vector<8x1xf32>
    %cst_3 = arith.constant 0.00195694715 : f32
    %10 = vector.broadcast %cst_3 : f32 to vector<8x1xf32>
    %11 = arith.mulf %9, %10 : vector<8x1xf32>
    %12 = math.sqrt %11 : vector<8x1xf32>
    %cst_4 = arith.constant 9.99999974E-6 : f32
    %13 = vector.broadcast %cst_4 : f32 to vector<8x1xf32>
    %14 = arith.addf %12, %13 : vector<8x1xf32>
    %cst_5 = arith.constant 1.000000e+00 : f32
    %15 = vector.broadcast %cst_5 : f32 to vector<8x1xf32>
    %16 = arith.divf %15, %14 : vector<8x1xf32>
    %17 = vector.broadcast %16 : vector<8x1xf32> to vector<8x512xf32>
    %18 = arith.mulf %6, %17 : vector<8x512xf32>
    %19 = arith.truncf %18 : vector<8x512xf32> to vector<8x512xbf16>
    %c0_6 = arith.constant 0 : index
    %c0_7 = arith.constant 0 : index
    %20 = vector.load %arg2[%c0_6, %c0_7] : memref<512x512xbf16, #tpu.memory_space<vmem>>, vector<512x512xbf16>
    %cst_8 = arith.constant dense<0.000000e+00> : vector<8x512xf32>
    %21 = tpu.matmul %19, %20, %cst_8 {dimension_numbers = #tpu.dot_dimension_numbers<[1], [0], [0], [1], [0, 0, 1, 1], [], []>} : vector<8x512xbf16>, vector<512x512xbf16>, vector<8x512xf32> -> vector<8x512xf32>
    %cst_9 = arith.constant 0.00398406386 : f32
    %22 = vector.broadcast %cst_9 : f32 to vector<8x512xf32>
    %23 = arith.mulf %21, %22 : vector<8x512xf32>
    %24 = arith.subf %18, %23 : vector<8x512xf32>
    %25 = arith.mulf %24, %24 : vector<8x512xf32>
    %26 = arith.truncf %25 : vector<8x512xf32> to vector<8x512xbf16>
    %c0_10 = arith.constant 0 : index
    %c0_11 = arith.constant 0 : index
    %27 = vector.load %arg3[%c0_10, %c0_11] : memref<512x512xbf16, #tpu.memory_space<vmem>>, vector<512x512xbf16>
    %cst_12 = arith.constant dense<0.000000e+00> : vector<8x512xf32>
    %28 = tpu.matmul %26, %27, %cst_12 {dimension_numbers = #tpu.dot_dimension_numbers<[1], [0], [0], [1], [0, 0, 1, 1], [], []>} : vector<8x512xbf16>, vector<512x512xbf16>, vector<8x512xf32> -> vector<8x512xf32>
    %29 = math.sqrt %28 : vector<8x512xf32>
    %cst_13 = arith.constant 0.0446767062 : f32
    %30 = vector.broadcast %cst_13 : f32 to vector<8x512xf32>
    %31 = arith.mulf %29, %30 : vector<8x512xf32>
    %cst_14 = arith.constant 9.99999974E-6 : f32
    %32 = vector.broadcast %cst_14 : f32 to vector<8x512xf32>
    %33 = arith.addf %31, %32 : vector<8x512xf32>
    %34 = arith.divf %24, %33 : vector<8x512xf32>
    %c0_15 = arith.constant 0 : index
    %c0_16 = arith.constant 0 : index
    %35 = vector.load %arg4[%c0_15, %c0_16] : memref<8x512xf32, #tpu.memory_space<vmem>>, vector<8x512xf32>
    tpu.vector_store %arg4[%c0_15, %c0_16], %34 {strides = array<i32>} : memref<8x512xf32, #tpu.memory_space<vmem>>, vector<8x512xf32>,
    return
  }
  func.func @transform_0(%arg0: i32) -> (i32, i32) {
    %c0_i32 = arith.constant 0 : i32
    %c0_i32_0 = arith.constant 0 : i32
    return %arg0, %c0_i32 : i32, i32
  }
  func.func @transform_1(%arg0: i32) -> (i32, i32) {
    %c0_i32 = arith.constant 0 : i32
    %c0_i32_0 = arith.constant 0 : i32
    %c0_i32_1 = arith.constant 0 : i32
    return %c0_i32, %c0_i32_0 : i32, i32
  }
  func.func @transform_2(%arg0: i32) -> (i32, i32) {
    %c0_i32 = arith.constant 0 : i32
    %c0_i32_0 = arith.constant 0 : i32
    %c0_i32_1 = arith.constant 0 : i32
    return %c0_i32, %c0_i32_0 : i32, i32
  }
  func.func @transform_3(%arg0: i32) -> (i32, i32) {
    %c0_i32 = arith.constant 0 : i32
    %c0_i32_0 = arith.constant 0 : i32
    return %arg0, %c0_i32 : i32, i32
  }
}

</mosaic_0001>

<llo_original>
// kernel: tpu_custom_call.1
$region0: #{tpu_custom_call.1}
  #allocation0 [shape = 'u32[]', space=smem, size = 0x4, offset = 0x4, fixed_abs, tag = 'smem constant byte address 0x4 - core index']
  #allocation1 [shape = 'u32[72,128]{1,0:T(1,128)}', space=vmem, size = 0x9000, scoped, tag = 'internal scratch']
  %s0 = inlined_call_operand.hbm [shape: f32[8,512], index: 0, kind: input, shape index: {}]
  %s1 = inlined_call_operand.hbm [shape: bf16[512,512], index: 1, kind: input, shape index: {}]
  %s2 = inlined_call_operand.hbm [shape: bf16[512,512], index: 2, kind: input, shape index: {}]
  %s3 = inlined_call_operand.hbm [shape: f32[8,512], index: 3, kind: output, shape index: {}]
  %s4 = sld [smem:[#allocation0]]
  $region34: #{tpu_custom_call.1} parent=0
    _
  %s6 = ssub.s32 1, %s4
  %s7 = scalar_select 0, %s6, %s4
  $region1: #{tpu_custom_call.1} parent=0
    #allocation2 [shape = 'u8[16384]{0}', space=vmem, size = 0x4000, scoped, tag = 'input window, operand 0, single buffered']
    #allocation3 [shape = 's32[1]{0}', space=sflag, size = 0x4, scoped, tag = 'scoped memory for tpu_custom_call.1']
    #allocation4 [shape = 's32[1]{0}', space=sflag, size = 0x4, scoped, tag = 'scoped memory for tpu_custom_call.1']
    #allocation5 [shape = 'u8[524288]{0}', space=vmem, size = 0x80000, scoped, tag = 'input window, operand 1, single buffered']
    #allocation6 [shape = 's32[1]{0}', space=sflag, size = 0x4, scoped, tag = 'scoped memory for tpu_custom_call.1']
    #allocation7 [shape = 'u8[524288]{0}', space=vmem, size = 0x80000, scoped, tag = 'input window, operand 2, single buffered']
    #allocation8 [shape = 'u8[16384]{0}', space=vmem, size = 0x4000, scoped, tag = 'output window, operand 0, single buffered']
    %8 = vsyncpa [#allocation3], 0
    %9 = vsyncpa [#allocation6], 0
    %10 = vsyncpa [#allocation4], 0
    // Predicated region
    $region2: #{tpu_custom_call.1} parent=1 // pred_check
      _
    $region3: #{tpu_custom_call.1} parent=1 // pred_check_branch
      %12 = sbr.rel (0) target = $region5
    $region4: #{tpu_custom_call.1} parent=1 // pred_region
      %14 = vsyncadd [#allocation3], 0
      %s16 = sshll.u32 %s0, 4
      %s17 = int_to_ptr.hbm [resolvable:$true] %s16
      %s18 = sshll.u32 [#allocation2], 4
      %s19 = int_to_ptr.vmem [resolvable:$true] %s18
      %21 = dma.hbm_to_vmem [thread:$0]  %s17, 512, %s19, [#allocation3]
    $region5: #{tpu_custom_call.1} parent=1 // pred_fallthru
      _
    // Predicated region
    $region6: #{tpu_custom_call.1} parent=1 // pred_check
      _
    $region7: #{tpu_custom_call.1} parent=1 // pred_check_branch
      %23 = sbr.rel (0) target = $region9
    $region8: #{tpu_custom_call.1} parent=1 // pred_region
      %25 = vsyncadd [#allocation6], 0
      %s26 = sshll.u32 %s1, 4
      %s27 = int_to_ptr.hbm [resolvable:$true] %s26
      %s28 = sshll.u32 [#allocation5], 4
      %s29 = int_to_ptr.vmem [resolvable:$true] %s28
      %34 = dma.hbm_to_vmem [thread:$0]  %s27, 16384, %s29, [#allocation6], 256, 256, 16
    $region9: #{tpu_custom_call.1} parent=1 // pred_fallthru
      _
    // Predicated region
    $region10: #{tpu_custom_call.1} parent=1 // pred_check
      _
    $region11: #{tpu_custom_call.1} parent=1 // pred_check_branch
      %36 = sbr.rel (0) target = $region13
    $region12: #{tpu_custom_call.1} parent=1 // pred_region
      %38 = vsyncadd [#allocation6], 0
      %s39 = sshll.u32 %s2, 4
      %s40 = int_to_ptr.hbm [resolvable:$true] %s39
      %s41 = sshll.u32 [#allocation7], 4
      %s42 = int_to_ptr.vmem [resolvable:$true] %s41
      %47 = dma.hbm_to_vmem [thread:$0]  %s40, 16384, %s42, [#allocation6], 256, 256, 16
    $region13: #{tpu_custom_call.1} parent=1 // pred_fallthru
      _
    // Predicated region
    $region14: #{tpu_custom_call.1} parent=1 // pred_check
      _
    $region15: #{tpu_custom_call.1} parent=1 // pred_check_branch
      %49 = sbr.rel (0) target = $region17
    $region16: #{tpu_custom_call.1} parent=1 // pred_region
      %51 = dma.done [#allocation3], 512
    $region17: #{tpu_custom_call.1} parent=1 // pred_fallthru
      _
    // Predicated region
    $region18: #{tpu_custom_call.1} parent=1 // pred_check
      _
    $region19: #{tpu_custom_call.1} parent=1 // pred_check_branch
      %53 = sbr.rel (0) target = $region21
    $region20: #{tpu_custom_call.1} parent=1 // pred_region
      %55 = dma.done [#allocation6], 16384
    $region21: #{tpu_custom_call.1} parent=1 // pred_fallthru
      _
    // Predicated region
    $region22: #{tpu_custom_call.1} parent=1 // pred_check
      _
    $region23: #{tpu_custom_call.1} parent=1 // pred_check_branch
      %57 = sbr.rel (0) target = $region25
    $region24: #{tpu_custom_call.1} parent=1 // pred_region
      %59 = dma.done [#allocation6], 16384
    $region25: #{tpu_custom_call.1} parent=1 // pred_fallthru
      _
    %v60 = vld [vmem:[#allocation2] sm:$0xff]
    %v61 = vld [vmem:[#allocation2 + $0x8] sm:$0xff]
    %v62 = vld [vmem:[#allocation2 + $0x10] sm:$0xff]
    %v63 = vld [vmem:[#allocation2 + $0x18] sm:$0xff]
    %v64 = vadd.f32 %v60, %v61
    %v65 = vadd.f32 %v64, %v62
    %v66 = vadd.f32 %v65, %v63
    %67 = vadd.xlane.f32.xlu0 %v66
    %v68 = vpop.xlane.xlu0 %67
    %v69 = vmul.f32 %v68, 0.001953125
    %v70 = vsub.f32 %v60, %v69
    %v71 = vsub.f32 %v61, %v69
    %v72 = vsub.f32 %v62, %v69
    %v73 = vsub.f32 %v63, %v69
    %v74 = vmul.f32 %v70, %v70
    %v75 = vmul.f32 %v71, %v71
    %v76 = vmul.f32 %v72, %v72
    %v77 = vmul.f32 %v73, %v73
    %v78 = vadd.f32 %v74, %v75
    %v79 = vadd.f32 %v78, %v76
    %v80 = vadd.f32 %v79, %v77
    %81 = vadd.xlane.f32.xlu0 %v80
    %v82 = vpop.xlane.xlu0 %81
    %v83 = vmul.f32 %v82, 0.0019569471
    %v84 = vrsqrt.pop %v83
    %v85 = vmul.f32 %v84, %v83
    %v86 = vmul.f32 %v85, %v84
    %v87 = vmul.f32 0.5, %v86
    %v88 = vsub.f32 1.5, %v87
    %v89 = vmul.f32 %v84, %v88
    %v90 = vmul.f32 %v83, %v89
    %vm91 = vcmp.eq.f32.partialorder %v83, inf
    %v92 = vsel %vm91, %v83, %v90
    %vm93 = vcmp.eq.f32.partialorder %v83, 0.0
    %v94 = vand.u32 %v83, 2147483648
    %v95 = vsel %vm93, %v94, %v92
    %v96 = vadd.f32 %v95, 1e-05
    %v97 = vrcp.pop %v96
    %v98 = vmul.f32 %v96, %v97
    %v99 = vsub.f32 1.0, %v98
    %v100 = vmul.f32 %v97, %v99
    %v101 = vadd.f32 %v97, %v100
    %vm102 = vweird.f32 %v96
    %vm103 = vweird.f32 %v97
    %vm104 = vmor %vm102, %vm103
    %v105 = vsel %vm104, %v97, %v101
    %v106 = vand.u32 2147483647, %v96
    %vm107 = vcmp.eq.f32.partialorder %v106, 8.507059e+37
    %v108 = vand.u32 %v96, 2147483648
    %v109 = vor.u32 1.1754944e-38, %v108
    %v110 = vsel %vm107, %v109, %v105
    %v111 = vmul.f32 1.0, %v110
    %v112 = vmul.f32 %v70, %v111
    %v113 = vmul.f32 %v71, %v111
    %v114 = vmul.f32 %v72, %v111
    %v115 = vmul.f32 %v73, %v111
    %v116 = vpack.c.bf16 %v112, %v112
    %v117 = vpack.c.bf16 %v113, %v113
    %v118 = vpack.c.bf16 %v114, %v114
    %v119 = vpack.c.bf16 %v115, %v115
    %v120 = vld [vmem:[#allocation5] sm:$0xff]
    %v121 = vld [vmem:[#allocation5 + $0x8] sm:$0xff]
    %v122 = vld [vmem:[#allocation5 + $0x10] sm:$0xff]
    %v123 = vld [vmem:[#allocation5 + $0x18] sm:$0xff]
    %v124 = vld [vmem:[#allocation5 + $0x20] sm:$0xff]
    %v125 = vld [vmem:[#allocation5 + $0x28] sm:$0xff]
    %v126 = vld [vmem:[#allocation5 + $0x30] sm:$0xff]
    %v127 = vld [vmem:[#allocation5 + $0x38] sm:$0xff]
    %v128 = vld [vmem:[#allocation5 + $0x40] sm:$0xff]
    %v129 = vld [vmem:[#allocation5 + $0x48] sm:$0xff]
    %v130 = vld [vmem:[#allocation5 + $0x50] sm:$0xff]
    %v131 = vld [vmem:[#allocation5 + $0x58] sm:$0xff]
    %v132 = vld [vmem:[#allocation5 + $0x60] sm:$0xff]
    %v133 = vld [vmem:[#allocation5 + $0x68] sm:$0xff]
    %v134 = vld [vmem:[#allocation5 + $0x70] sm:$0xff]
    %v135 = vld [vmem:[#allocation5 + $0x78] sm:$0xff]
    %v136 = vld [vmem:[#allocation5 + $0x80] sm:$0xff]
    %v137 = vld [vmem:[#allocation5 + $0x88] sm:$0xff]
    %v138 = vld [vmem:[#allocation5 + $0x90] sm:$0xff]
    %v139 = vld [vmem:[#allocation5 + $0x98] sm:$0xff]
    %v140 = vld [vmem:[#allocation5 + $0xa0] sm:$0xff]
    %v141 = vld [vmem:[#allocation5 + $0xa8] sm:$0xff]
    %v142 = vld [vmem:[#allocation5 + $0xb0] sm:$0xff]
    %v143 = vld [vmem:[#allocation5 + $0xb8] sm:$0xff]
    %v144 = vld [vmem:[#allocation5 + $0xc0] sm:$0xff]
    %v145 = vld [vmem:[#allocation5 + $0xc8] sm:$0xff]
    %v146 = vld [vmem:[#allocation5 + $0xd0] sm:$0xff]
    %v147 = vld [vmem:[#allocation5 + $0xd8] sm:$0xff]
    %v148 = vld [vmem:[#allocation5 + $0xe0] sm:$0xff]
    %v149 = vld [vmem:[#allocation5 + $0xe8] sm:$0xff]
    %v150 = vld [vmem:[#allocation5 + $0xf0] sm:$0xff]
    %v151 = vld [vmem:[#allocation5 + $0xf8] sm:$0xff]
    %v152 = vld [vmem:[#allocation5 + $0x100] sm:$0xff]
    %v153 = vld [vmem:[#allocation5 + $0x108] sm:$0xff]
    %v154 = vld [vmem:[#allocation5 + $0x110] sm:$0xff]
    %v155 = vld [vmem:[#allocation5 + $0x118] sm:$0xff]
    %v156 = vld [vmem:[#allocation5 + $0x120] sm:$0xff]
    %v157 = vld [vmem:[#allocation5 + $0x128] sm:$0xff]
    %v158 = vld [vmem:[#allocation5 + $0x130] sm:$0xff]
    %v159 = vld [vmem:[#allocation5 + $0x138] sm:$0xff]
    %v160 = vld [vmem:[#allocation5 + $0x140] sm:$0xff]
    %v161 = vld [vmem:[#allocation5 + $0x148] sm:$0xff]
    %v162 = vld [vmem:[#allocation5 + $0x150] sm:$0xff]
    %v163 = vld [vmem:[#allocation5 + $0x158] sm:$0xff]
    %v164 = vld [vmem:[#allocation5 + $0x160] sm:$0xff]
    %v165 = vld [vmem:[#allocation5 + $0x168] sm:$0xff]
    %v166 = vld [vmem:[#allocation5 + $0x170] sm:$0xff]
    %v167 = vld [vmem:[#allocation5 + $0x178] sm:$0xff]
    %v168 = vld [vmem:[#allocation5 + $0x180] sm:$0xff]
    %v169 = vld [vmem:[#allocation5 + $0x188] sm:$0xff]
    %v170 = vld [vmem:[#allocation5 + $0x190] sm:$0xff]
    %v171 = vld [vmem:[#allocation5 + $0x198] sm:$0xff]
    %v172 = vld [vmem:[#allocation5 + $0x1a0] sm:$0xff]
    %v173 = vld [vmem:[#allocation5 + $0x1a8] sm:$0xff]
    %v174 = vld [vmem:[#allocation5 + $0x1b0] sm:$0xff]
    %v175 = vld [vmem:[#allocation5 + $0x1b8] sm:$0xff]
    %v176 = vld [vmem:[#allocation5 + $0x1c0] sm:$0xff]
    %v177 = vld [vmem:[#allocation5 + $0x1c8] sm:$0xff]
    %v178 = vld [vmem:[#allocation5 + $0x1d0] sm:$0xff]
    %v179 = vld [vmem:[#allocation5 + $0x1d8] sm:$0xff]
    %v180 = vld [vmem:[#allocation5 + $0x1e0] sm:$0xff]
    %v181 = vld [vmem:[#allocation5 + $0x1e8] sm:$0xff]
    %v182 = vld [vmem:[#allocation5 + $0x1f0] sm:$0xff]
    %v183 = vld [vmem:[#allocation5 + $0x1f8] sm:$0xff]
    %v184 = vld [vmem:[#allocation5 + $0x200] sm:$0xff]
    %v185 = vld [vmem:[#allocation5 + $0x208] sm:$0xff]
    %v186 = vld [vmem:[#allocation5 + $0x210] sm:$0xff]
    %v187 = vld [vmem:[#allocation5 + $0x218] sm:$0xff]
    %v188 = vld [vmem:[#allocation5 + $0x220] sm:$0xff]
    %v189 = vld [vmem:[#allocation5 + $0x228] sm:$0xff]
    %v190 = vld [vmem:[#allocation5 + $0x230] sm:$0xff]
    %v191 = vld [vmem:[#allocation5 + $0x238] sm:$0xff]
    %v192 = vld [vmem:[#allocation5 + $0x240] sm:$0xff]
    %v193 = vld [vmem:[#allocation5 + $0x248] sm:$0xff]
    %v194 = vld [vmem:[#allocation5 + $0x250] sm:$0xff]
    %v195 = vld [vmem:[#allocation5 + $0x258] sm:$0xff]
    %v196 = vld [vmem:[#allocation5 + $0x260] sm:$0xff]
    %v197 = vld [vmem:[#allocation5 + $0x268] sm:$0xff]
    %v198 = vld [vmem:[#allocation5 + $0x270] sm:$0xff]
    %v199 = vld [vmem:[#allocation5 + $0x278] sm:$0xff]
    %v200 = vld [vmem:[#allocation5 + $0x280] sm:$0xff]
    %v201 = vld [vmem:[#allocation5 + $0x288] sm:$0xff]
    %v202 = vld [vmem:[#allocation5 + $0x290] sm:$0xff]
    %v203 = vld [vmem:[#allocation5 + $0x298] sm:$0xff]
    %v204 = vld [vmem:[#allocation5 + $0x2a0] sm:$0xff]
    %v205 = vld [vmem:[#allocation5 + $0x2a8] sm:$0xff]
    %v206 = vld [vmem:[#allocation5 + $0x2b0] sm:$0xff]
    %v207 = vld [vmem:[#allocation5 + $0x2b8] sm:$0xff]
    %v208 = vld [vmem:[#allocation5 + $0x2c0] sm:$0xff]
    %v209 = vld [vmem:[#allocation5 + $0x2c8] sm:$0xff]
    %v210 = vld [vmem:[#allocation5 + $0x2d0] sm:$0xff]
    %v211 = vld [vmem:[#allocation5 + $0x2d8] sm:$0xff]
    %v212 = vld [vmem:[#allocation5 + $0x2e0] sm:$0xff]
    %v213 = vld [vmem:[#allocation5 + $0x2e8] sm:$0xff]
    %v214 = vld [vmem:[#allocation5 + $0x2f0] sm:$0xff]
    %v215 = vld [vmem:[#allocation5 + $0x2f8] sm:$0xff]
    %v216 = vld [vmem:[#allocation5 + $0x300] sm:$0xff]
    %v217 = vld [vmem:[#allocation5 + $0x308] sm:$0xff]
    %v218 = vld [vmem:[#allocation5 + $0x310] sm:$0xff]
    %v219 = vld [vmem:[#allocation5 + $0x318] sm:$0xff]
    %v220 = vld [vmem:[#allocation5 + $0x320] sm:$0xff]
    %v221 = vld [vmem:[#allocation5 + $0x328] sm:$0xff]
    %v222 = vld [vmem:[#allocation5 + $0x330] sm:$0xff]
    %v223 = vld [vmem:[#allocation5 + $0x338] sm:$0xff]
    %v224 = vld [vmem:[#allocation5 + $0x340] sm:$0xff]
    %v225 = vld [vmem:[#allocation5 + $0x348] sm:$0xff]
    %v226 = vld [vmem:[#allocation5 + $0x350] sm:$0xff]
    %v227 = vld [vmem:[#allocation5 + $0x358] sm:$0xff]
    %v228 = vld [vmem:[#allocation5 + $0x360] sm:$0xff]
    %v229 = vld [vmem:[#allocation5 + $0x368] sm:$0xff]
    %v230 = vld [vmem:[#allocation5 + $0x370] sm:$0xff]
    %v231 = vld [vmem:[#allocation5 + $0x378] sm:$0xff]
    %v232 = vld [vmem:[#allocation5 + $0x380] sm:$0xff]
    %v233 = vld [vmem:[#allocation5 + $0x388] sm:$0xff]
    %v234 = vld [vmem:[#allocation5 + $0x390] sm:$0xff]
    %v235 = vld [vmem:[#allocation5 + $0x398] sm:$0xff]
    %v236 = vld [vmem:[#allocation5 + $0x3a0] sm:$0xff]
    %v237 = vld [vmem:[#allocation5 + $0x3a8] sm:$0xff]
    %v238 = vld [vmem:[#allocation5 + $0x3b0] sm:$0xff]
    %v239 = vld [vmem:[#allocation5 + $0x3b8] sm:$0xff]
    %v240 = vld [vmem:[#allocation5 + $0x3c0] sm:$0xff]
    %v241 = vld [vmem:[#allocation5 + $0x3c8] sm:$0xff]
    %v242 = vld [vmem:[#allocation5 + $0x3d0] sm:$0xff]
    %v243 = vld [vmem:[#allocation5 + $0x3d8] sm:$0xff]
    %v244 = vld [vmem:[#allocation5 + $0x3e0] sm:$0xff]
    %v245 = vld [vmem:[#allocation5 + $0x3e8] sm:$0xff]
    %v246 = vld [vmem:[#allocation5 + $0x3f0] sm:$0xff]
    %v247 = vld [vmem:[#allocation5 + $0x3f8] sm:$0xff]
    %v376 = vunpack.c.l.b16 %v120
    %v377 = vunpack.c.h.b16 %v120
    %v378 = vunpack.c.l.b16 %v121
    %v379 = vunpack.c.h.b16 %v121
    %v380 = vunpack.c.l.b16 %v122
    %v381 = vunpack.c.h.b16 %v122
    %v382 = vunpack.c.l.b16 %v123
    %v383 = vunpack.c.h.b16 %v123
    %v384 = vunpack.c.l.b16 %v124
    %v385 = vunpack.c.h.b16 %v124
    %v386 = vunpack.c.l.b16 %v125
    %v387 = vunpack.c.h.b16 %v125
    %v388 = vunpack.c.l.b16 %v126
    %v389 = vunpack.c.h.b16 %v126
    %v390 = vunpack.c.l.b16 %v127
    %v391 = vunpack.c.h.b16 %v127
    %v392 = vunpack.c.l.b16 %v128
    %v393 = vunpack.c.h.b16 %v128
    %v394 = vunpack.c.l.b16 %v129
    %v395 = vunpack.c.h.b16 %v129
    %v396 = vunpack.c.l.b16 %v130
    %v397 = vunpack.c.h.b16 %v130
    %v398 = vunpack.c.l.b16 %v131
    %v399 = vunpack.c.h.b16 %v131
    %v400 = vunpack.c.l.b16 %v132
    %v401 = vunpack.c.h.b16 %v132
    %v402 = vunpack.c.l.b16 %v133
    %v403 = vunpack.c.h.b16 %v133
    %v404 = vunpack.c.l.b16 %v134
    %v405 = vunpack.c.h.b16 %v134
    %v406 = vunpack.c.l.b16 %v135
    %v407 = vunpack.c.h.b16 %v135
    %v408 = vunpack.c.l.b16 %v136
    %v409 = vunpack.c.h.b16 %v136
    %v410 = vunpack.c.l.b16 %v137
    %v411 = vunpack.c.h.b16 %v137
    %v412 = vunpack.c.l.b16 %v138
    %v413 = vunpack.c.h.b16 %v138
    %v414 = vunpack.c.l.b16 %v139
    %v415 = vunpack.c.h.b16 %v139
    %v416 = vunpack.c.l.b16 %v140
    %v417 = vunpack.c.h.b16 %v140
    %v418 = vunpack.c.l.b16 %v141
    %v419 = vunpack.c.h.b16 %v141
    %v420 = vunpack.c.l.b16 %v142
    %v421 = vunpack.c.h.b16 %v142
    %v422 = vunpack.c.l.b16 %v143
    %v423 = vunpack.c.h.b16 %v143
    %v424 = vunpack.c.l.b16 %v144
    %v425 = vunpack.c.h.b16 %v144
    %v426 = vunpack.c.l.b16 %v145
    %v427 = vunpack.c.h.b16 %v145
    %v428 = vunpack.c.l.b16 %v146
    %v429 = vunpack.c.h.b16 %v146
    %v430 = vunpack.c.l.b16 %v147
    %v431 = vunpack.c.h.b16 %v147
    %v432 = vunpack.c.l.b16 %v148
    %v433 = vunpack.c.h.b16 %v148
    %v434 = vunpack.c.l.b16 %v149
    %v435 = vunpack.c.h.b16 %v149
    %v436 = vunpack.c.l.b16 %v150
    %v437 = vunpack.c.h.b16 %v150
    %v438 = vunpack.c.l.b16 %v151
    %v439 = vunpack.c.h.b16 %v151
    %v440 = vunpack.c.l.b16 %v152
    %v441 = vunpack.c.h.b16 %v152
    %v442 = vunpack.c.l.b16 %v153
    %v443 = vunpack.c.h.b16 %v153
    %v444 = vunpack.c.l.b16 %v154
    %v445 = vunpack.c.h.b16 %v154
    %v446 = vunpack.c.l.b16 %v155
    %v447 = vunpack.c.h.b16 %v155
    %v448 = vunpack.c.l.b16 %v156
    %v449 = vunpack.c.h.b16 %v156
    %v450 = vunpack.c.l.b16 %v157
    %v451 = vunpack.c.h.b16 %v157
    %v452 = vunpack.c.l.b16 %v158
    %v453 = vunpack.c.h.b16 %v158
    %v454 = vunpack.c.l.b16 %v159
    %v455 = vunpack.c.h.b16 %v159
    %v456 = vunpack.c.l.b16 %v160
    %v457 = vunpack.c.h.b16 %v160
    %v458 = vunpack.c.l.b16 %v161
    %v459 = vunpack.c.h.b16 %v161
    %v460 = vunpack.c.l.b16 %v162
    %v461 = vunpack.c.h.b16 %v162
    %v462 = vunpack.c.l.b16 %v163
    %v463 = vunpack.c.h.b16 %v163
    %v464 = vunpack.c.l.b16 %v164
    %v465 = vunpack.c.h.b16 %v164
    %v466 = vunpack.c.l.b16 %v165
    %v467 = vunpack.c.h.b16 %v165
    %v468 = vunpack.c.l.b16 %v166
    %v469 = vunpack.c.h.b16 %v166
    %v470 = vunpack.c.l.b16 %v167
    %v471 = vunpack.c.h.b16 %v167
    %v472 = vunpack.c.l.b16 %v168
    %v473 = vunpack.c.h.b16 %v168
    %v474 = vunpack.c.l.b16 %v169
    %v475 = vunpack.c.h.b16 %v169
    %v476 = vunpack.c.l.b16 %v170
    %v477 = vunpack.c.h.b16 %v170
    %v478 = vunpack.c.l.b16 %v171
    %v479 = vunpack.c.h.b16 %v171
    %v480 = vunpack.c.l.b16 %v172
    %v481 = vunpack.c.h.b16 %v172
    %v482 = vunpack.c.l.b16 %v173
    %v483 = vunpack.c.h.b16 %v173
    %v484 = vunpack.c.l.b16 %v174
    %v485 = vunpack.c.h.b16 %v174
    %v486 = vunpack.c.l.b16 %v175
    %v487 = vunpack.c.h.b16 %v175
    %v488 = vunpack.c.l.b16 %v176
    %v489 = vunpack.c.h.b16 %v176
    %v490 = vunpack.c.l.b16 %v177
    %v491 = vunpack.c.h.b16 %v177
    %v492 = vunpack.c.l.b16 %v178
    %v493 = vunpack.c.h.b16 %v178
    %v494 = vunpack.c.l.b16 %v179
    %v495 = vunpack.c.h.b16 %v179
    %v496 = vunpack.c.l.b16 %v180
    %v497 = vunpack.c.h.b16 %v180
    %v498 = vunpack.c.l.b16 %v181
    %v499 = vunpack.c.h.b16 %v181
    %v500 = vunpack.c.l.b16 %v182
    %v501 = vunpack.c.h.b16 %v182
    %v502 = vunpack.c.l.b16 %v183
    %v503 = vunpack.c.h.b16 %v183
    %v504 = vunpack.c.l.b16 %v184
    %v505 = vunpack.c.h.b16 %v184
    %v506 = vunpack.c.l.b16 %v185
    %v507 = vunpack.c.h.b16 %v185
    %v508 = vunpack.c.l.b16 %v186
    %v509 = vunpack.c.h.b16 %v186
    %v510 = vunpack.c.l.b16 %v187
    %v511 = vunpack.c.h.b16 %v187
    %v512 = vunpack.c.l.b16 %v188
    %v513 = vunpack.c.h.b16 %v188
    %v514 = vunpack.c.l.b16 %v189
    %v515 = vunpack.c.h.b16 %v189
    %v516 = vunpack.c.l.b16 %v190
    %v517 = vunpack.c.h.b16 %v190
    %v518 = vunpack.c.l.b16 %v191
    %v519 = vunpack.c.h.b16 %v191
    %v520 = vunpack.c.l.b16 %v192
    %v521 = vunpack.c.h.b16 %v192
    %v522 = vunpack.c.l.b16 %v193
    %v523 = vunpack.c.h.b16 %v193
    %v524 = vunpack.c.l.b16 %v194
    %v525 = vunpack.c.h.b16 %v194
    %v526 = vunpack.c.l.b16 %v195
    %v527 = vunpack.c.h.b16 %v195
    %v528 = vunpack.c.l.b16 %v196
    %v529 = vunpack.c.h.b16 %v196
    %v530 = vunpack.c.l.b16 %v197
    %v531 = vunpack.c.h.b16 %v197
    %v532 = vunpack.c.l.b16 %v198
    %v533 = vunpack.c.h.b16 %v198
    %v534 = vunpack.c.l.b16 %v199
    %v535 = vunpack.c.h.b16 %v199
    %v536 = vunpack.c.l.b16 %v200
    %v537 = vunpack.c.h.b16 %v200
    %v538 = vunpack.c.l.b16 %v201
    %v539 = vunpack.c.h.b16 %v201
    %v540 = vunpack.c.l.b16 %v202
    %v541 = vunpack.c.h.b16 %v202
    %v542 = vunpack.c.l.b16 %v203
    %v543 = vunpack.c.h.b16 %v203
    %v544 = vunpack.c.l.b16 %v204
    %v545 = vunpack.c.h.b16 %v204
    %v546 = vunpack.c.l.b16 %v205
    %v547 = vunpack.c.h.b16 %v205
    %v548 = vunpack.c.l.b16 %v206
    %v549 = vunpack.c.h.b16 %v206
    %v550 = vunpack.c.l.b16 %v207
    %v551 = vunpack.c.h.b16 %v207
    %v552 = vunpack.c.l.b16 %v208
    %v553 = vunpack.c.h.b16 %v208
    %v554 = vunpack.c.l.b16 %v209
    %v555 = vunpack.c.h.b16 %v209
    %v556 = vunpack.c.l.b16 %v210
    %v557 = vunpack.c.h.b16 %v210
    %v558 = vunpack.c.l.b16 %v211
    %v559 = vunpack.c.h.b16 %v211
    %v560 = vunpack.c.l.b16 %v212
    %v561 = vunpack.c.h.b16 %v212
    %v562 = vunpack.c.l.b16 %v213
    %v563 = vunpack.c.h.b16 %v213
    %v564 = vunpack.c.l.b16 %v214
    %v565 = vunpack.c.h.b16 %v214
    %v566 = vunpack.c.l.b16 %v215
    %v567 = vunpack.c.h.b16 %v215
    %v568 = vunpack.c.l.b16 %v216
    %v569 = vunpack.c.h.b16 %v216
    %v570 = vunpack.c.l.b16 %v217
    %v571 = vunpack.c.h.b16 %v217
    %v572 = vunpack.c.l.b16 %v218
    %v573 = vunpack.c.h.b16 %v218
    %v574 = vunpack.c.l.b16 %v219
    %v575 = vunpack.c.h.b16 %v219
    %v576 = vunpack.c.l.b16 %v220
    %v577 = vunpack.c.h.b16 %v220
    %v578 = vunpack.c.l.b16 %v221
    %v579 = vunpack.c.h.b16 %v221
    %v580 = vunpack.c.l.b16 %v222
    %v581 = vunpack.c.h.b16 %v222
    %v582 = vunpack.c.l.b16 %v223
    %v583 = vunpack.c.h.b16 %v223
    %v584 = vunpack.c.l.b16 %v224
    %v585 = vunpack.c.h.b16 %v224
    %v586 = vunpack.c.l.b16 %v225
    %v587 = vunpack.c.h.b16 %v225
    %v588 = vunpack.c.l.b16 %v226
    %v589 = vunpack.c.h.b16 %v226
    %v590 = vunpack.c.l.b16 %v227
    %v591 = vunpack.c.h.b16 %v227
    %v592 = vunpack.c.l.b16 %v228
    %v593 = vunpack.c.h.b16 %v228
    %v594 = vunpack.c.l.b16 %v229
    %v595 = vunpack.c.h.b16 %v229
    %v596 = vunpack.c.l.b16 %v230
    %v597 = vunpack.c.h.b16 %v230
    %v598 = vunpack.c.l.b16 %v231
    %v599 = vunpack.c.h.b16 %v231
    %v600 = vunpack.c.l.b16 %v232
    %v601 = vunpack.c.h.b16 %v232
    %v602 = vunpack.c.l.b16 %v233
    %v603 = vunpack.c.h.b16 %v233
    %v604 = vunpack.c.l.b16 %v234
    %v605 = vunpack.c.h.b16 %v234
    %v606 = vunpack.c.l.b16 %v235
    %v607 = vunpack.c.h.b16 %v235
    %v608 = vunpack.c.l.b16 %v236
    %v609 = vunpack.c.h.b16 %v236
    %v610 = vunpack.c.l.b16 %v237
    %v611 = vunpack.c.h.b16 %v237
    %v612 = vunpack.c.l.b16 %v238
    %v613 = vunpack.c.h.b16 %v238
    %v614 = vunpack.c.l.b16 %v239
    %v615 = vunpack.c.h.b16 %v239
    %v616 = vunpack.c.l.b16 %v240
    %v617 = vunpack.c.h.b16 %v240
    %v618 = vunpack.c.l.b16 %v241
    %v619 = vunpack.c.h.b16 %v241
    %v620 = vunpack.c.l.b16 %v242
    %v621 = vunpack.c.h.b16 %v242
    %v622 = vunpack.c.l.b16 %v243
    %v623 = vunpack.c.h.b16 %v243
    %v624 = vunpack.c.l.b16 %v244
    %v625 = vunpack.c.h.b16 %v244
    %v626 = vunpack.c.l.b16 %v245
    %v627 = vunpack.c.h.b16 %v245
    %v628 = vunpack.c.l.b16 %v246
    %v629 = vunpack.c.h.b16 %v246
    %v630 = vunpack.c.l.b16 %v247
    %v631 = vunpack.c.h.b16 %v247
    %v632 = vpack.c.b16 %v380, %v376
    %v633 = vpack.c.b16 %v381, %v377
    %v634 = vpack.c.b16 %v382, %v378
    %v635 = vpack.c.b16 %v383, %v379
    %v636 = vpack.c.b16 %v388, %v384
    %v637 = vpack.c.b16 %v389, %v385
    %v638 = vpack.c.b16 %v390, %v386
    %v639 = vpack.c.b16 %v391, %v387
    %v640 = vpack.c.b16 %v396, %v392
    %v641 = vpack.c.b16 %v397, %v393
    %v642 = vpack.c.b16 %v398, %v394
    %v643 = vpack.c.b16 %v399, %v395
    %v644 = vpack.c.b16 %v404, %v400
    %v645 = vpack.c.b16 %v405, %v401
    %v646 = vpack.c.b16 %v406, %v402
    %v647 = vpack.c.b16 %v407, %v403
    %v648 = vpack.c.b16 %v412, %v408
    %v649 = vpack.c.b16 %v413, %v409
    %v650 = vpack.c.b16 %v414, %v410
    %v651 = vpack.c.b16 %v415, %v411
    %v652 = vpack.c.b16 %v420, %v416
    %v653 = vpack.c.b16 %v421, %v417
    %v654 = vpack.c.b16 %v422, %v418
    %v655 = vpack.c.b16 %v423, %v419
    %v656 = vpack.c.b16 %v428, %v424
    %v657 = vpack.c.b16 %v429, %v425
    %v658 = vpack.c.b16 %v430, %v426
    %v659 = vpack.c.b16 %v431, %v427
    %v660 = vpack.c.b16 %v436, %v432
    %v661 = vpack.c.b16 %v437, %v433
    %v662 = vpack.c.b16 %v438, %v434
    %v663 = vpack.c.b16 %v439, %v435
    %v664 = vpack.c.b16 %v444, %v440
    %v665 = vpack.c.b16 %v445, %v441
    %v666 = vpack.c.b16 %v446, %v442
    %v667 = vpack.c.b16 %v447, %v443
    %v668 = vpack.c.b16 %v452, %v448
    %v669 = vpack.c.b16 %v453, %v449
    %v670 = vpack.c.b16 %v454, %v450
    %v671 = vpack.c.b16 %v455, %v451
    %v672 = vpack.c.b16 %v460, %v456
    %v673 = vpack.c.b16 %v461, %v457
    %v674 = vpack.c.b16 %v462, %v458
    %v675 = vpack.c.b16 %v463, %v459
    %v676 = vpack.c.b16 %v468, %v464
    %v677 = vpack.c.b16 %v469, %v465
    %v678 = vpack.c.b16 %v470, %v466
    %v679 = vpack.c.b16 %v471, %v467
    %v680 = vpack.c.b16 %v476, %v472
    %v681 = vpack.c.b16 %v477, %v473
    %v682 = vpack.c.b16 %v478, %v474
    %v683 = vpack.c.b16 %v479, %v475
    %v684 = vpack.c.b16 %v484, %v480
    %v685 = vpack.c.b16 %v485, %v481
    %v686 = vpack.c.b16 %v486, %v482
    %v687 = vpack.c.b16 %v487, %v483
    %v688 = vpack.c.b16 %v492, %v488
    %v689 = vpack.c.b16 %v493, %v489
    %v690 = vpack.c.b16 %v494, %v490
    %v691 = vpack.c.b16 %v495, %v491
    %v692 = vpack.c.b16 %v500, %v496
    %v693 = vpack.c.b16 %v501, %v497
    %v694 = vpack.c.b16 %v502, %v498
    %v695 = vpack.c.b16 %v503, %v499
    %v696 = vpack.c.b16 %v508, %v504
    %v697 = vpack.c.b16 %v509, %v505
    %v698 = vpack.c.b16 %v510, %v506
    %v699 = vpack.c.b16 %v511, %v507
    %v700 = vpack.c.b16 %v516, %v512
    %v701 = vpack.c.b16 %v517, %v513
    %v702 = vpack.c.b16 %v518, %v514
    %v703 = vpack.c.b16 %v519, %v515
    %v704 = vpack.c.b16 %v524, %v520
    %v705 = vpack.c.b16 %v525, %v521
    %v706 = vpack.c.b16 %v526, %v522
    %v707 = vpack.c.b16 %v527, %v523
    %v708 = vpack.c.b16 %v532, %v528
    %v709 = vpack.c.b16 %v533, %v529
    %v710 = vpack.c.b16 %v534, %v530
    %v711 = vpack.c.b16 %v535, %v531
    %v712 = vpack.c.b16 %v540, %v536
    %v713 = vpack.c.b16 %v541, %v537
    %v714 = vpack.c.b16 %v542, %v538
    %v715 = vpack.c.b16 %v543, %v539
    %v716 = vpack.c.b16 %v548, %v544
    %v717 = vpack.c.b16 %v549, %v545
    %v718 = vpack.c.b16 %v550, %v546
    %v719 = vpack.c.b16 %v551, %v547
    %v720 = vpack.c.b16 %v556, %v552
    %v721 = vpack.c.b16 %v557, %v553
    %v722 = vpack.c.b16 %v558, %v554
    %v723 = vpack.c.b16 %v559, %v555
    %v724 = vpack.c.b16 %v564, %v560
    %v725 = vpack.c.b16 %v565, %v561
    %v726 = vpack.c.b16 %v566, %v562
    %v727 = vpack.c.b16 %v567, %v563
    %v728 = vpack.c.b16 %v572, %v568
    %v729 = vpack.c.b16 %v573, %v569
    %v730 = vpack.c.b16 %v574, %v570
    %v731 = vpack.c.b16 %v575, %v571
    %v732 = vpack.c.b16 %v580, %v576
    %v733 = vpack.c.b16 %v581, %v577
    %v734 = vpack.c.b16 %v582, %v578
    %v735 = vpack.c.b16 %v583, %v579
    %v736 = vpack.c.b16 %v588, %v584
    %v737 = vpack.c.b16 %v589, %v585
    %v738 = vpack.c.b16 %v590, %v586
    %v739 = vpack.c.b16 %v591, %v587
    %v740 = vpack.c.b16 %v596, %v592
    %v741 = vpack.c.b16 %v597, %v593
    %v742 = vpack.c.b16 %v598, %v594
    %v743 = vpack.c.b16 %v599, %v595
    %v744 = vpack.c.b16 %v604, %v600
    %v745 = vpack.c.b16 %v605, %v601
    %v746 = vpack.c.b16 %v606, %v602
    %v747 = vpack.c.b16 %v607, %v603
    %v748 = vpack.c.b16 %v612, %v608
    %v749 = vpack.c.b16 %v613, %v609
    %v750 = vpack.c.b16 %v614, %v610
    %v751 = vpack.c.b16 %v615, %v611
    %v752 = vpack.c.b16 %v620, %v616
    %v753 = vpack.c.b16 %v621, %v617
    %v754 = vpack.c.b16 %v622, %v618
    %v755 = vpack.c.b16 %v623, %v619
    %v756 = vpack.c.b16 %v628, %v624
    %v757 = vpack.c.b16 %v629, %v625
    %v758 = vpack.c.b16 %v630, %v626
    %v759 = vpack.c.b16 %v631, %v627
    %888 = vmatpush.bf16.msra.mxu0 %v660
    %889 = vmatpush.bf16.msra.mxu0 %v656
    %890 = vmatpush.bf16.msra.mxu0 %v652
    %891 = vmatpush.bf16.msra.mxu0 %v648
    %892 = vmatpush.bf16.msra.mxu0 %v644
    %893 = vmatpush.bf16.msra.mxu0 %v640
    %894 = vmatpush.bf16.msra.mxu0 %v636
    %895 = vmatpush.bf16.msra.mxu0 %v632
    %896 = vmatmul.bf16.gmra.mxu0 %v116
    %v897 = vpop.f32.mrf.mxu0
    %v898 = vadd.f32 0.0, %v897
    %v899 = vpop.f32.mrf.mxu0
    %900 = vdwg.mxu0
    %901 = vmatpush.bf16.msra.mxu0 %v692
    %902 = vmatpush.bf16.msra.mxu0 %v688
    %903 = vmatpush.bf16.msra.mxu0 %v684
    %904 = vmatpush.bf16.msra.mxu0 %v680
    %905 = vmatpush.bf16.msra.mxu0 %v676
    %906 = vmatpush.bf16.msra.mxu0 %v672
    %907 = vmatpush.bf16.msra.mxu0 %v668
    %908 = vmatpush.bf16.msra.mxu0 %v664
    %909 = vmatmul.bf16.gmra.mxu0 %v117
    %v910 = vpop.f32.mrf.mxu0
    %v911 = vadd.f32 %v898, %v910
    %v912 = vpop.f32.mrf.mxu0
    %913 = vdwg.mxu0
    %914 = vmatpush.bf16.msra.mxu0 %v724
    %915 = vmatpush.bf16.msra.mxu0 %v720
    %916 = vmatpush.bf16.msra.mxu0 %v716
    %917 = vmatpush.bf16.msra.mxu0 %v712
    %918 = vmatpush.bf16.msra.mxu0 %v708
    %919 = vmatpush.bf16.msra.mxu0 %v704
    %920 = vmatpush.bf16.msra.mxu0 %v700
    %921 = vmatpush.bf16.msra.mxu0 %v696
    %922 = vmatmul.bf16.gmra.mxu0 %v118
    %v923 = vpop.f32.mrf.mxu0
    %v924 = vadd.f32 %v911, %v923
    %v925 = vpop.f32.mrf.mxu0
    %926 = vdwg.mxu0
    %927 = vmatpush.bf16.msra.mxu0 %v756
    %928 = vmatpush.bf16.msra.mxu0 %v752
    %929 = vmatpush.bf16.msra.mxu0 %v748
    %930 = vmatpush.bf16.msra.mxu0 %v744
    %931 = vmatpush.bf16.msra.mxu0 %v740
    %932 = vmatpush.bf16.msra.mxu0 %v736
    %933 = vmatpush.bf16.msra.mxu0 %v732
    %934 = vmatpush.bf16.msra.mxu0 %v728
    %935 = vmatmul.bf16.gmra.mxu0 %v119
    %v936 = vpop.f32.mrf.mxu0
    %v937 = vadd.f32 %v924, %v936
    %v938 = vpop.f32.mrf.mxu0
    %939 = vdwg.mxu0
    %940 = vmatpush.bf16.msra.mxu0 %v661
    %941 = vmatpush.bf16.msra.mxu0 %v657
    %942 = vmatpush.bf16.msra.mxu0 %v653
    %943 = vmatpush.bf16.msra.mxu0 %v649
    %944 = vmatpush.bf16.msra.mxu0 %v645
    %945 = vmatpush.bf16.msra.mxu0 %v641
    %946 = vmatpush.bf16.msra.mxu0 %v637
    %947 = vmatpush.bf16.msra.mxu0 %v633
    %948 = vmatmul.bf16.gmra.mxu0 %v116
    %v949 = vpop.f32.mrf.mxu0
    %v950 = vadd.f32 0.0, %v949
    %v951 = vpop.f32.mrf.mxu0
    %952 = vdwg.mxu0
    %953 = vmatpush.bf16.msra.mxu0 %v693
    %954 = vmatpush.bf16.msra.mxu0 %v689
    %955 = vmatpush.bf16.msra.mxu0 %v685
    %956 = vmatpush.bf16.msra.mxu0 %v681
    %957 = vmatpush.bf16.msra.mxu0 %v677
    %958 = vmatpush.bf16.msra.mxu0 %v673
    %959 = vmatpush.bf16.msra.mxu0 %v669
    %960 = vmatpush.bf16.msra.mxu0 %v665
    %961 = vmatmul.bf16.gmra.mxu0 %v117
    %v962 = vpop.f32.mrf.mxu0
    %v963 = vadd.f32 %v950, %v962
    %v964 = vpop.f32.mrf.mxu0
    %965 = vdwg.mxu0
    %966 = vmatpush.bf16.msra.mxu0 %v725
    %967 = vmatpush.bf16.msra.mxu0 %v721
    %968 = vmatpush.bf16.msra.mxu0 %v717
    %969 = vmatpush.bf16.msra.mxu0 %v713
    %970 = vmatpush.bf16.msra.mxu0 %v709
    %971 = vmatpush.bf16.msra.mxu0 %v705
    %972 = vmatpush.bf16.msra.mxu0 %v701
    %973 = vmatpush.bf16.msra.mxu0 %v697
    %974 = vmatmul.bf16.gmra.mxu0 %v118
    %v975 = vpop.f32.mrf.mxu0
    %v976 = vadd.f32 %v963, %v975
    %v977 = vpop.f32.mrf.mxu0
    %978 = vdwg.mxu0
    %979 = vmatpush.bf16.msra.mxu0 %v757
    %980 = vmatpush.bf16.msra.mxu0 %v753
    %981 = vmatpush.bf16.msra.mxu0 %v749
    %982 = vmatpush.bf16.msra.mxu0 %v745
    %983 = vmatpush.bf16.msra.mxu0 %v741
    %984 = vmatpush.bf16.msra.mxu0 %v737
    %985 = vmatpush.bf16.msra.mxu0 %v733
    %986 = vmatpush.bf16.msra.mxu0 %v729
    %987 = vmatmul.bf16.gmra.mxu0 %v119
    %v988 = vpop.f32.mrf.mxu0
    %v989 = vadd.f32 %v976, %v988
    %v990 = vpop.f32.mrf.mxu0
    %991 = vdwg.mxu0
    %992 = vmatpush.bf16.msra.mxu0 %v662
    %993 = vmatpush.bf16.msra.mxu0 %v658
    %994 = vmatpush.bf16.msra.mxu0 %v654
    %995 = vmatpush.bf16.msra.mxu0 %v650
    %996 = vmatpush.bf16.msra.mxu0 %v646
    %997 = vmatpush.bf16.msra.mxu0 %v642
    %998 = vmatpush.bf16.msra.mxu0 %v638
    %999 = vmatpush.bf16.msra.mxu0 %v634
    %1000 = vmatmul.bf16.gmra.mxu0 %v116
    %v1001 = vpop.f32.mrf.mxu0
    %v1002 = vadd.f32 0.0, %v1001
    %v1003 = vpop.f32.mrf.mxu0
    %1004 = vdwg.mxu0
    %1005 = vmatpush.bf16.msra.mxu0 %v694
    %1006 = vmatpush.bf16.msra.mxu0 %v690
    %1007 = vmatpush.bf16.msra.mxu0 %v686
    %1008 = vmatpush.bf16.msra.mxu0 %v682
    %1009 = vmatpush.bf16.msra.mxu0 %v678
    %1010 = vmatpush.bf16.msra.mxu0 %v674
    %1011 = vmatpush.bf16.msra.mxu0 %v670
    %1012 = vmatpush.bf16.msra.mxu0 %v666
    %1013 = vmatmul.bf16.gmra.mxu0 %v117
    %v1014 = vpop.f32.mrf.mxu0
    %v1015 = vadd.f32 %v1002, %v1014
    %v1016 = vpop.f32.mrf.mxu0
    %1017 = vdwg.mxu0
    %1018 = vmatpush.bf16.msra.mxu0 %v726
    %1019 = vmatpush.bf16.msra.mxu0 %v722
    %1020 = vmatpush.bf16.msra.mxu0 %v718
    %1021 = vmatpush.bf16.msra.mxu0 %v714
    %1022 = vmatpush.bf16.msra.mxu0 %v710
    %1023 = vmatpush.bf16.msra.mxu0 %v706
    %1024 = vmatpush.bf16.msra.mxu0 %v702
    %1025 = vmatpush.bf16.msra.mxu0 %v698
    %1026 = vmatmul.bf16.gmra.mxu0 %v118
    %v1027 = vpop.f32.mrf.mxu0
    %v1028 = vadd.f32 %v1015, %v1027
    %v1029 = vpop.f32.mrf.mxu0
    %1030 = vdwg.mxu0
    %1031 = vmatpush.bf16.msra.mxu0 %v758
    %1032 = vmatpush.bf16.msra.mxu0 %v754
    %1033 = vmatpush.bf16.msra.mxu0 %v750
    %1034 = vmatpush.bf16.msra.mxu0 %v746
    %1035 = vmatpush.bf16.msra.mxu0 %v742
    %1036 = vmatpush.bf16.msra.mxu0 %v738
    %1037 = vmatpush.bf16.msra.mxu0 %v734
    %1038 = vmatpush.bf16.msra.mxu0 %v730
    %1039 = vmatmul.bf16.gmra.mxu0 %v119
    %v1040 = vpop.f32.mrf.mxu0
    %v1041 = vadd.f32 %v1028, %v1040
    %v1042 = vpop.f32.mrf.mxu0
    %1043 = vdwg.mxu0
    %1044 = vmatpush.bf16.msra.mxu0 %v663
    %1045 = vmatpush.bf16.msra.mxu0 %v659
    %1046 = vmatpush.bf16.msra.mxu0 %v655
    %1047 = vmatpush.bf16.msra.mxu0 %v651
    %1048 = vmatpush.bf16.msra.mxu0 %v647
    %1049 = vmatpush.bf16.msra.mxu0 %v643
    %1050 = vmatpush.bf16.msra.mxu0 %v639
    %1051 = vmatpush.bf16.msra.mxu0 %v635
    %1052 = vmatmul.bf16.gmra.mxu0 %v116
    %v1053 = vpop.f32.mrf.mxu0
    %v1054 = vadd.f32 0.0, %v1053
    %v1055 = vpop.f32.mrf.mxu0
    %1056 = vdwg.mxu0
    %1057 = vmatpush.bf16.msra.mxu0 %v695
    %1058 = vmatpush.bf16.msra.mxu0 %v691
    %1059 = vmatpush.bf16.msra.mxu0 %v687
    %1060 = vmatpush.bf16.msra.mxu0 %v683
    %1061 = vmatpush.bf16.msra.mxu0 %v679
    %1062 = vmatpush.bf16.msra.mxu0 %v675
    %1063 = vmatpush.bf16.msra.mxu0 %v671
    %1064 = vmatpush.bf16.msra.mxu0 %v667
    %1065 = vmatmul.bf16.gmra.mxu0 %v117
    %v1066 = vpop.f32.mrf.mxu0
    %v1067 = vadd.f32 %v1054, %v1066
    %v1068 = vpop.f32.mrf.mxu0
    %1069 = vdwg.mxu0
    %1070 = vmatpush.bf16.msra.mxu0 %v727
    %1071 = vmatpush.bf16.msra.mxu0 %v723
    %1072 = vmatpush.bf16.msra.mxu0 %v719
    %1073 = vmatpush.bf16.msra.mxu0 %v715
    %1074 = vmatpush.bf16.msra.mxu0 %v711
    %1075 = vmatpush.bf16.msra.mxu0 %v707
    %1076 = vmatpush.bf16.msra.mxu0 %v703
    %1077 = vmatpush.bf16.msra.mxu0 %v699
    %1078 = vmatmul.bf16.gmra.mxu0 %v118
    %v1079 = vpop.f32.mrf.mxu0
    %v1080 = vadd.f32 %v1067, %v1079
    %v1081 = vpop.f32.mrf.mxu0
    %1082 = vdwg.mxu0
    %1083 = vmatpush.bf16.msra.mxu0 %v759
    %1084 = vmatpush.bf16.msra.mxu0 %v755
    %1085 = vmatpush.bf16.msra.mxu0 %v751
    %1086 = vmatpush.bf16.msra.mxu0 %v747
    %1087 = vmatpush.bf16.msra.mxu0 %v743
    %1088 = vmatpush.bf16.msra.mxu0 %v739
    %1089 = vmatpush.bf16.msra.mxu0 %v735
    %1090 = vmatpush.bf16.msra.mxu0 %v731
    %1091 = vmatmul.bf16.gmra.mxu0 %v119
    %v1092 = vpop.f32.mrf.mxu0
    %v1093 = vadd.f32 %v1080, %v1092
    %v1094 = vpop.f32.mrf.mxu0
    %1095 = vdwg.mxu0
    %v1096 = vmul.f32 %v937, 0.003984064
    %v1097 = vmul.f32 %v989, 0.003984064
    %v1098 = vmul.f32 %v1041, 0.003984064
    %v1099 = vmul.f32 %v1093, 0.003984064
    %v1100 = vsub.f32 %v112, %v1096
    %v1101 = vsub.f32 %v113, %v1097
    %v1102 = vsub.f32 %v114, %v1098
    %v1103 = vsub.f32 %v115, %v1099
    %v1104 = vmul.f32 %v1100, %v1100
    %v1105 = vmul.f32 %v1101, %v1101
    %v1106 = vmul.f32 %v1102, %v1102
    %v1107 = vmul.f32 %v1103, %v1103
    %v1108 = vpack.c.bf16 %v1104, %v1104
    %v1109 = vpack.c.bf16 %v1105, %v1105
    %v1110 = vpack.c.bf16 %v1106, %v1106
    %v1111 = vpack.c.bf16 %v1107, %v1107
    %v1112 = vld [vmem:[#allocation7] sm:$0xff]
    %v1113 = vld [vmem:[#allocation7 + $0x8] sm:$0xff]
    %v1114 = vld [vmem:[#allocation7 + $0x10] sm:$0xff]
    %v1115 = vld [vmem:[#allocation7 + $0x18] sm:$0xff]
    %v1116 = vld [vmem:[#allocation7 + $0x20] sm:$0xff]
    %v1117 = vld [vmem:[#allocation7 + $0x28] sm:$0xff]
    %v1118 = vld [vmem:[#allocation7 + $0x30] sm:$0xff]
    %v1119 = vld [vmem:[#allocation7 + $0x38] sm:$0xff]
    %v1120 = vld [vmem:[#allocation7 + $0x40] sm:$0xff]
    %v1121 = vld [vmem:[#allocation7 + $0x48] sm:$0xff]
    %v1122 = vld [vmem:[#allocation7 + $0x50] sm:$0xff]
    %v1123 = vld [vmem:[#allocation7 + $0x58] sm:$0xff]
    %v1124 = vld [vmem:[#allocation7 + $0x60] sm:$0xff]
    %v1125 = vld [vmem:[#allocation7 + $0x68] sm:$0xff]
    %v1126 = vld [vmem:[#allocation7 + $0x70] sm:$0xff]
    %v1127 = vld [vmem:[#allocation7 + $0x78] sm:$0xff]
    %v1128 = vld [vmem:[#allocation7 + $0x80] sm:$0xff]
    %v1129 = vld [vmem:[#allocation7 + $0x88] sm:$0xff]
    %v1130 = vld [vmem:[#allocation7 + $0x90] sm:$0xff]
    %v1131 = vld [vmem:[#allocation7 + $0x98] sm:$0xff]
    %v1132 = vld [vmem:[#allocation7 + $0xa0] sm:$0xff]
    %v1133 = vld [vmem:[#allocation7 + $0xa8] sm:$0xff]
    %v1134 = vld [vmem:[#allocation7 + $0xb0] sm:$0xff]
    %v1135 = vld [vmem:[#allocation7 + $0xb8] sm:$0xff]
    %v1136 = vld [vmem:[#allocation7 + $0xc0] sm:$0xff]
    %v1137 = vld [vmem:[#allocation7 + $0xc8] sm:$0xff]
    %v1138 = vld [vmem:[#allocation7 + $0xd0] sm:$0xff]
    %v1139 = vld [vmem:[#allocation7 + $0xd8] sm:$0xff]
    %v1140 = vld [vmem:[#allocation7 + $0xe0] sm:$0xff]
    %v1141 = vld [vmem:[#allocation7 + $0xe8] sm:$0xff]
    %v1142 = vld [vmem:[#allocation7 + $0xf0] sm:$0xff]
    %v1143 = vld [vmem:[#allocation7 + $0xf8] sm:$0xff]
    %v1144 = vld [vmem:[#allocation7 + $0x100] sm:$0xff]
    %v1145 = vld [vmem:[#allocation7 + $0x108] sm:$0xff]
    %v1146 = vld [vmem:[#allocation7 + $0x110] sm:$0xff]
    %v1147 = vld [vmem:[#allocation7 + $0x118] sm:$0xff]
    %v1148 = vld [vmem:[#allocation7 + $0x120] sm:$0xff]
    %v1149 = vld [vmem:[#allocation7 + $0x128] sm:$0xff]
    %v1150 = vld [vmem:[#allocation7 + $0x130] sm:$0xff]
    %v1151 = vld [vmem:[#allocation7 + $0x138] sm:$0xff]
    %v1152 = vld [vmem:[#allocation7 + $0x140] sm:$0xff]
    %v1153 = vld [vmem:[#allocation7 + $0x148] sm:$0xff]
    %v1154 = vld [vmem:[#allocation7 + $0x150] sm:$0xff]
    %v1155 = vld [vmem:[#allocation7 + $0x158] sm:$0xff]
    %v1156 = vld [vmem:[#allocation7 + $0x160] sm:$0xff]
    %v1157 = vld [vmem:[#allocation7 + $0x168] sm:$0xff]
    %v1158 = vld [vmem:[#allocation7 + $0x170] sm:$0xff]
    %v1159 = vld [vmem:[#allocation7 + $0x178] sm:$0xff]
    %v1160 = vld [vmem:[#allocation7 + $0x180] sm:$0xff]
    %v1161 = vld [vmem:[#allocation7 + $0x188] sm:$0xff]
    %v1162 = vld [vmem:[#allocation7 + $0x190] sm:$0xff]
    %v1163 = vld [vmem:[#allocation7 + $0x198] sm:$0xff]
    %v1164 = vld [vmem:[#allocation7 + $0x1a0] sm:$0xff]
    %v1165 = vld [vmem:[#allocation7 + $0x1a8] sm:$0xff]
    %v1166 = vld [vmem:[#allocation7 + $0x1b0] sm:$0xff]
    %v1167 = vld [vmem:[#allocation7 + $0x1b8] sm:$0xff]
    %v1168 = vld [vmem:[#allocation7 + $0x1c0] sm:$0xff]
    %v1169 = vld [vmem:[#allocation7 + $0x1c8] sm:$0xff]
    %v1170 = vld [vmem:[#allocation7 + $0x1d0] sm:$0xff]
    %v1171 = vld [vmem:[#allocation7 + $0x1d8] sm:$0xff]
    %v1172 = vld [vmem:[#allocation7 + $0x1e0] sm:$0xff]
    %v1173 = vld [vmem:[#allocation7 + $0x1e8] sm:$0xff]
    %v1174 = vld [vmem:[#allocation7 + $0x1f0] sm:$0xff]
    %v1175 = vld [vmem:[#allocation7 + $0x1f8] sm:$0xff]
    %v1176 = vld [vmem:[#allocation7 + $0x200] sm:$0xff]
    %v1177 = vld [vmem:[#allocation7 + $0x208] sm:$0xff]
    %v1178 = vld [vmem:[#allocation7 + $0x210] sm:$0xff]
    %v1179 = vld [vmem:[#allocation7 + $0x218] sm:$0xff]
    %v1180 = vld [vmem:[#allocation7 + $0x220] sm:$0xff]
    %v1181 = vld [vmem:[#allocation7 + $0x228] sm:$0xff]
    %v1182 = vld [vmem:[#allocation7 + $0x230] sm:$0xff]
    %v1183 = vld [vmem:[#allocation7 + $0x238] sm:$0xff]
    %v1184 = vld [vmem:[#allocation7 + $0x240] sm:$0xff]
    %v1185 = vld [vmem:[#allocation7 + $0x248] sm:$0xff]
    %v1186 = vld [vmem:[#allocation7 + $0x250] sm:$0xff]
    %v1187 = vld [vmem:[#allocation7 + $0x258] sm:$0xff]
    %v1188 = vld [vmem:[#allocation7 + $0x260] sm:$0xff]
    %v1189 = vld [vmem:[#allocation7 + $0x268] sm:$0xff]
    %v1190 = vld [vmem:[#allocation7 + $0x270] sm:$0xff]
    %v1191 = vld [vmem:[#allocation7 + $0x278] sm:$0xff]
    %v1192 = vld [vmem:[#allocation7 + $0x280] sm:$0xff]
    %v1193 = vld [vmem:[#allocation7 + $0x288] sm:$0xff]
    %v1194 = vld [vmem:[#allocation7 + $0x290] sm:$0xff]
    %v1195 = vld [vmem:[#allocation7 + $0x298] sm:$0xff]
    %v1196 = vld [vmem:[#allocation7 + $0x2a0] sm:$0xff]
    %v1197 = vld [vmem:[#allocation7 + $0x2a8] sm:$0xff]
    %v1198 = vld [vmem:[#allocation7 + $0x2b0] sm:$0xff]
    %v1199 = vld [vmem:[#allocation7 + $0x2b8] sm:$0xff]
    %v1200 = vld [vmem:[#allocation7 + $0x2c0] sm:$0xff]
    %v1201 = vld [vmem:[#allocation7 + $0x2c8] sm:$0xff]
    %v1202 = vld [vmem:[#allocation7 + $0x2d0] sm:$0xff]
    %v1203 = vld [vmem:[#allocation7 + $0x2d8] sm:$0xff]
    %v1204 = vld [vmem:[#allocation7 + $0x2e0] sm:$0xff]
    %v1205 = vld [vmem:[#allocation7 + $0x2e8] sm:$0xff]
    %v1206 = vld [vmem:[#allocation7 + $0x2f0] sm:$0xff]
    %v1207 = vld [vmem:[#allocation7 + $0x2f8] sm:$0xff]
    %v1208 = vld [vmem:[#allocation7 + $0x300] sm:$0xff]
    %v1209 = vld [vmem:[#allocation7 + $0x308] sm:$0xff]
    %v1210 = vld [vmem:[#allocation7 + $0x310] sm:$0xff]
    %v1211 = vld [vmem:[#allocation7 + $0x318] sm:$0xff]
    %v1212 = vld [vmem:[#allocation7 + $0x320] sm:$0xff]
    %v1213 = vld [vmem:[#allocation7 + $0x328] sm:$0xff]
    %v1214 = vld [vmem:[#allocation7 + $0x330] sm:$0xff]
    %v1215 = vld [vmem:[#allocation7 + $0x338] sm:$0xff]
    %v1216 = vld [vmem:[#allocation7 + $0x340] sm:$0xff]
    %v1217 = vld [vmem:[#allocation7 + $0x348] sm:$0xff]
    %v1218 = vld [vmem:[#allocation7 + $0x350] sm:$0xff]
    %v1219 = vld [vmem:[#allocation7 + $0x358] sm:$0xff]
    %v1220 = vld [vmem:[#allocation7 + $0x360] sm:$0xff]
    %v1221 = vld [vmem:[#allocation7 + $0x368] sm:$0xff]
    %v1222 = vld [vmem:[#allocation7 + $0x370] sm:$0xff]
    %v1223 = vld [vmem:[#allocation7 + $0x378] sm:$0xff]
    %v1224 = vld [vmem:[#allocation7 + $0x380] sm:$0xff]
    %v1225 = vld [vmem:[#allocation7 + $0x388] sm:$0xff]
    %v1226 = vld [vmem:[#allocation7 + $0x390] sm:$0xff]
    %v1227 = vld [vmem:[#allocation7 + $0x398] sm:$0xff]
    %v1228 = vld [vmem:[#allocation7 + $0x3a0] sm:$0xff]
    %v1229 = vld [vmem:[#allocation7 + $0x3a8] sm:$0xff]
    %v1230 = vld [vmem:[#allocation7 + $0x3b0] sm:$0xff]
    %v1231 = vld [vmem:[#allocation7 + $0x3b8] sm:$0xff]
    %v1232 = vld [vmem:[#allocation7 + $0x3c0] sm:$0xff]
    %v1233 = vld [vmem:[#allocation7 + $0x3c8] sm:$0xff]
    %v1234 = vld [vmem:[#allocation7 + $0x3d0] sm:$0xff]
    %v1235 = vld [vmem:[#allocation7 + $0x3d8] sm:$0xff]
    %v1236 = vld [vmem:[#allocation7 + $0x3e0] sm:$0xff]
    %v1237 = vld [vmem:[#allocation7 + $0x3e8] sm:$0xff]
    %v1238 = vld [vmem:[#allocation7 + $0x3f0] sm:$0xff]
    %v1239 = vld [vmem:[#allocation7 + $0x3f8] sm:$0xff]
    %v1368 = vunpack.c.l.b16 %v1112
    %v1369 = vunpack.c.h.b16 %v1112
    %v1370 = vunpack.c.l.b16 %v1113
    %v1371 = vunpack.c.h.b16 %v1113
    %v1372 = vunpack.c.l.b16 %v1114
    %v1373 = vunpack.c.h.b16 %v1114
    %v1374 = vunpack.c.l.b16 %v1115
    %v1375 = vunpack.c.h.b16 %v1115
    %v1376 = vunpack.c.l.b16 %v1116
    %v1377 = vunpack.c.h.b16 %v1116
    %v1378 = vunpack.c.l.b16 %v1117
    %v1379 = vunpack.c.h.b16 %v1117
    %v1380 = vunpack.c.l.b16 %v1118
    %v1381 = vunpack.c.h.b16 %v1118
    %v1382 = vunpack.c.l.b16 %v1119
    %v1383 = vunpack.c.h.b16 %v1119
    %v1384 = vunpack.c.l.b16 %v1120
    %v1385 = vunpack.c.h.b16 %v1120
    %v1386 = vunpack.c.l.b16 %v1121
    %v1387 = vunpack.c.h.b16 %v1121
    %v1388 = vunpack.c.l.b16 %v1122
    %v1389 = vunpack.c.h.b16 %v1122
    %v1390 = vunpack.c.l.b16 %v1123
    %v1391 = vunpack.c.h.b16 %v1123
    %v1392 = vunpack.c.l.b16 %v1124
    %v1393 = vunpack.c.h.b16 %v1124
    %v1394 = vunpack.c.l.b16 %v1125
    %v1395 = vunpack.c.h.b16 %v1125
    %v1396 = vunpack.c.l.b16 %v1126
    %v1397 = vunpack.c.h.b16 %v1126
    %v1398 = vunpack.c.l.b16 %v1127
    %v1399 = vunpack.c.h.b16 %v1127
    %v1400 = vunpack.c.l.b16 %v1128
    %v1401 = vunpack.c.h.b16 %v1128
    %v1402 = vunpack.c.l.b16 %v1129
    %v1403 = vunpack.c.h.b16 %v1129
    %v1404 = vunpack.c.l.b16 %v1130
    %v1405 = vunpack.c.h.b16 %v1130
    %v1406 = vunpack.c.l.b16 %v1131
    %v1407 = vunpack.c.h.b16 %v1131
    %v1408 = vunpack.c.l.b16 %v1132
    %v1409 = vunpack.c.h.b16 %v1132
    %v1410 = vunpack.c.l.b16 %v1133
    %v1411 = vunpack.c.h.b16 %v1133
    %v1412 = vunpack.c.l.b16 %v1134
    %v1413 = vunpack.c.h.b16 %v1134
    %v1414 = vunpack.c.l.b16 %v1135
    %v1415 = vunpack.c.h.b16 %v1135
    %v1416 = vunpack.c.l.b16 %v1136
    %v1417 = vunpack.c.h.b16 %v1136
    %v1418 = vunpack.c.l.b16 %v1137
    %v1419 = vunpack.c.h.b16 %v1137
    %v1420 = vunpack.c.l.b16 %v1138
    %v1421 = vunpack.c.h.b16 %v1138
    %v1422 = vunpack.c.l.b16 %v1139
    %v1423 = vunpack.c.h.b16 %v1139
    %v1424 = vunpack.c.l.b16 %v1140
    %v1425 = vunpack.c.h.b16 %v1140
    %v1426 = vunpack.c.l.b16 %v1141
    %v1427 = vunpack.c.h.b16 %v1141
    %v1428 = vunpack.c.l.b16 %v1142
    %v1429 = vunpack.c.h.b16 %v1142
    %v1430 = vunpack.c.l.b16 %v1143
    %v1431 = vunpack.c.h.b16 %v1143
    %v1432 = vunpack.c.l.b16 %v1144
    %v1433 = vunpack.c.h.b16 %v1144
    %v1434 = vunpack.c.l.b16 %v1145
    %v1435 = vunpack.c.h.b16 %v1145
    %v1436 = vunpack.c.l.b16 %v1146
    %v1437 = vunpack.c.h.b16 %v1146
    %v1438 = vunpack.c.l.b16 %v1147
    %v1439 = vunpack.c.h.b16 %v1147
    %v1440 = vunpack.c.l.b16 %v1148
    %v1441 = vunpack.c.h.b16 %v1148
    %v1442 = vunpack.c.l.b16 %v1149
    %v1443 = vunpack.c.h.b16 %v1149
    %v1444 = vunpack.c.l.b16 %v1150
    %v1445 = vunpack.c.h.b16 %v1150
    %v1446 = vunpack.c.l.b16 %v1151
    %v1447 = vunpack.c.h.b16 %v1151
    %v1448 = vunpack.c.l.b16 %v1152
    %v1449 = vunpack.c.h.b16 %v1152
    %v1450 = vunpack.c.l.b16 %v1153
    %v1451 = vunpack.c.h.b16 %v1153
    %v1452 = vunpack.c.l.b16 %v1154
    %v1453 = vunpack.c.h.b16 %v1154
    %v1454 = vunpack.c.l.b16 %v1155
    %v1455 = vunpack.c.h.b16 %v1155
    %v1456 = vunpack.c.l.b16 %v1156
    %v1457 = vunpack.c.h.b16 %v1156
    %v1458 = vunpack.c.l.b16 %v1157
    %v1459 = vunpack.c.h.b16 %v1157
    %v1460 = vunpack.c.l.b16 %v1158
    %v1461 = vunpack.c.h.b16 %v1158
    %v1462 = vunpack.c.l.b16 %v1159
    %v1463 = vunpack.c.h.b16 %v1159
    %v1464 = vunpack.c.l.b16 %v1160
    %v1465 = vunpack.c.h.b16 %v1160
    %v1466 = vunpack.c.l.b16 %v1161
    %v1467 = vunpack.c.h.b16 %v1161
    %v1468 = vunpack.c.l.b16 %v1162
    %v1469 = vunpack.c.h.b16 %v1162
    %v1470 = vunpack.c.l.b16 %v1163
    %v1471 = vunpack.c.h.b16 %v1163
    %v1472 = vunpack.c.l.b16 %v1164
    %v1473 = vunpack.c.h.b16 %v1164
    %v1474 = vunpack.c.l.b16 %v1165
    %v1475 = vunpack.c.h.b16 %v1165
    %v1476 = vunpack.c.l.b16 %v1166
    %v1477 = vunpack.c.h.b16 %v1166
    %v1478 = vunpack.c.l.b16 %v1167
    %v1479 = vunpack.c.h.b16 %v1167
    %v1480 = vunpack.c.l.b16 %v1168
    %v1481 = vunpack.c.h.b16 %v1168
    %v1482 = vunpack.c.l.b16 %v1169
    %v1483 = vunpack.c.h.b16 %v1169
    %v1484 = vunpack.c.l.b16 %v1170
    %v1485 = vunpack.c.h.b16 %v1170
    %v1486 = vunpack.c.l.b16 %v1171
    %v1487 = vunpack.c.h.b16 %v1171
    %v1488 = vunpack.c.l.b16 %v1172
    %v1489 = vunpack.c.h.b16 %v1172
    %v1490 = vunpack.c.l.b16 %v1173
    %v1491 = vunpack.c.h.b16 %v1173
    %v1492 = vunpack.c.l.b16 %v1174
    %v1493 = vunpack.c.h.b16 %v1174
    %v1494 = vunpack.c.l.b16 %v1175
    %v1495 = vunpack.c.h.b16 %v1175
    %v1496 = vunpack.c.l.b16 %v1176
    %v1497 = vunpack.c.h.b16 %v1176
    %v1498 = vunpack.c.l.b16 %v1177
    %v1499 = vunpack.c.h.b16 %v1177
    %v1500 = vunpack.c.l.b16 %v1178
    %v1501 = vunpack.c.h.b16 %v1178
    %v1502 = vunpack.c.l.b16 %v1179
    %v1503 = vunpack.c.h.b16 %v1179
    %v1504 = vunpack.c.l.b16 %v1180
    %v1505 = vunpack.c.h.b16 %v1180
    %v1506 = vunpack.c.l.b16 %v1181
    %v1507 = vunpack.c.h.b16 %v1181
    %v1508 = vunpack.c.l.b16 %v1182
    %v1509 = vunpack.c.h.b16 %v1182
    %v1510 = vunpack.c.l.b16 %v1183
    %v1511 = vunpack.c.h.b16 %v1183
    %v1512 = vunpack.c.l.b16 %v1184
    %v1513 = vunpack.c.h.b16 %v1184
    %v1514 = vunpack.c.l.b16 %v1185
    %v1515 = vunpack.c.h.b16 %v1185
    %v1516 = vunpack.c.l.b16 %v1186
    %v1517 = vunpack.c.h.b16 %v1186
    %v1518 = vunpack.c.l.b16 %v1187
    %v1519 = vunpack.c.h.b16 %v1187
    %v1520 = vunpack.c.l.b16 %v1188
    %v1521 = vunpack.c.h.b16 %v1188
    %v1522 = vunpack.c.l.b16 %v1189
    %v1523 = vunpack.c.h.b16 %v1189
    %v1524 = vunpack.c.l.b16 %v1190
    %v1525 = vunpack.c.h.b16 %v1190
    %v1526 = vunpack.c.l.b16 %v1191
    %v1527 = vunpack.c.h.b16 %v1191
    %v1528 = vunpack.c.l.b16 %v1192
    %v1529 = vunpack.c.h.b16 %v1192
    %v1530 = vunpack.c.l.b16 %v1193
    %v1531 = vunpack.c.h.b16 %v1193
    %v1532 = vunpack.c.l.b16 %v1194
    %v1533 = vunpack.c.h.b16 %v1194
    %v1534 = vunpack.c.l.b16 %v1195
    %v1535 = vunpack.c.h.b16 %v1195
    %v1536 = vunpack.c.l.b16 %v1196
    %v1537 = vunpack.c.h.b16 %v1196
    %v1538 = vunpack.c.l.b16 %v1197
    %v1539 = vunpack.c.h.b16 %v1197
    %v1540 = vunpack.c.l.b16 %v1198
    %v1541 = vunpack.c.h.b16 %v1198
    %v1542 = vunpack.c.l.b16 %v1199
    %v1543 = vunpack.c.h.b16 %v1199
    %v1544 = vunpack.c.l.b16 %v1200
    %v1545 = vunpack.c.h.b16 %v1200
    %v1546 = vunpack.c.l.b16 %v1201
    %v1547 = vunpack.c.h.b16 %v1201
    %v1548 = vunpack.c.l.b16 %v1202
    %v1549 = vunpack.c.h.b16 %v1202
    %v1550 = vunpack.c.l.b16 %v1203
    %v1551 = vunpack.c.h.b16 %v1203
    %v1552 = vunpack.c.l.b16 %v1204
    %v1553 = vunpack.c.h.b16 %v1204
    %v1554 = vunpack.c.l.b16 %v1205
    %v1555 = vunpack.c.h.b16 %v1205
    %v1556 = vunpack.c.l.b16 %v1206
    %v1557 = vunpack.c.h.b16 %v1206
    %v1558 = vunpack.c.l.b16 %v1207
    %v1559 = vunpack.c.h.b16 %v1207
    %v1560 = vunpack.c.l.b16 %v1208
    %v1561 = vunpack.c.h.b16 %v1208
    %v1562 = vunpack.c.l.b16 %v1209
    %v1563 = vunpack.c.h.b16 %v1209
    %v1564 = vunpack.c.l.b16 %v1210
    %v1565 = vunpack.c.h.b16 %v1210
    %v1566 = vunpack.c.l.b16 %v1211
    %v1567 = vunpack.c.h.b16 %v1211
    %v1568 = vunpack.c.l.b16 %v1212
    %v1569 = vunpack.c.h.b16 %v1212
    %v1570 = vunpack.c.l.b16 %v1213
    %v1571 = vunpack.c.h.b16 %v1213
    %v1572 = vunpack.c.l.b16 %v1214
    %v1573 = vunpack.c.h.b16 %v1214
    %v1574 = vunpack.c.l.b16 %v1215
    %v1575 = vunpack.c.h.b16 %v1215
    %v1576 = vunpack.c.l.b16 %v1216
    %v1577 = vunpack.c.h.b16 %v1216
    %v1578 = vunpack.c.l.b16 %v1217
    %v1579 = vunpack.c.h.b16 %v1217
    %v1580 = vunpack.c.l.b16 %v1218
    %v1581 = vunpack.c.h.b16 %v1218
    %v1582 = vunpack.c.l.b16 %v1219
    %v1583 = vunpack.c.h.b16 %v1219
    %v1584 = vunpack.c.l.b16 %v1220
    %v1585 = vunpack.c.h.b16 %v1220
    %v1586 = vunpack.c.l.b16 %v1221
    %v1587 = vunpack.c.h.b16 %v1221
    %v1588 = vunpack.c.l.b16 %v1222
    %v1589 = vunpack.c.h.b16 %v1222
    %v1590 = vunpack.c.l.b16 %v1223
    %v1591 = vunpack.c.h.b16 %v1223
    %v1592 = vunpack.c.l.b16 %v1224
    %v1593 = vunpack.c.h.b16 %v1224
    %v1594 = vunpack.c.l.b16 %v1225
    %v1595 = vunpack.c.h.b16 %v1225
    %v1596 = vunpack.c.l.b16 %v1226
    %v1597 = vunpack.c.h.b16 %v1226
    %v1598 = vunpack.c.l.b16 %v1227
    %v1599 = vunpack.c.h.b16 %v1227
    %v1600 = vunpack.c.l.b16 %v1228
    %v1601 = vunpack.c.h.b16 %v1228
    %v1602 = vunpack.c.l.b16 %v1229
    %v1603 = vunpack.c.h.b16 %v1229
    %v1604 = vunpack.c.l.b16 %v1230
    %v1605 = vunpack.c.h.b16 %v1230
    %v1606 = vunpack.c.l.b16 %v1231
    %v1607 = vunpack.c.h.b16 %v1231
    %v1608 = vunpack.c.l.b16 %v1232
    %v1609 = vunpack.c.h.b16 %v1232
    %v1610 = vunpack.c.l.b16 %v1233
    %v1611 = vunpack.c.h.b16 %v1233
    %v1612 = vunpack.c.l.b16 %v1234
    %v1613 = vunpack.c.h.b16 %v1234
    %v1614 = vunpack.c.l.b16 %v1235
    %v1615 = vunpack.c.h.b16 %v1235
    %v1616 = vunpack.c.l.b16 %v1236
    %v1617 = vunpack.c.h.b16 %v1236
    %v1618 = vunpack.c.l.b16 %v1237
    %v1619 = vunpack.c.h.b16 %v1237
    %v1620 = vunpack.c.l.b16 %v1238
    %v1621 = vunpack.c.h.b16 %v1238
    %v1622 = vunpack.c.l.b16 %v1239
    %v1623 = vunpack.c.h.b16 %v1239
    %v1624 = vpack.c.b16 %v1372, %v1368
    %v1625 = vpack.c.b16 %v1373, %v1369
    %v1626 = vpack.c.b16 %v1374, %v1370
    %v1627 = vpack.c.b16 %v1375, %v1371
    %v1628 = vpack.c.b16 %v1380, %v1376
    %v1629 = vpack.c.b16 %v1381, %v1377
    %v1630 = vpack.c.b16 %v1382, %v1378
    %v1631 = vpack.c.b16 %v1383, %v1379
    %v1632 = vpack.c.b16 %v1388, %v1384
    %v1633 = vpack.c.b16 %v1389, %v1385
    %v1634 = vpack.c.b16 %v1390, %v1386
    %v1635 = vpack.c.b16 %v1391, %v1387
    %v1636 = vpack.c.b16 %v1396, %v1392
    %v1637 = vpack.c.b16 %v1397, %v1393
    %v1638 = vpack.c.b16 %v1398, %v1394
    %v1639 = vpack.c.b16 %v1399, %v1395
    %v1640 = vpack.c.b16 %v1404, %v1400
    %v1641 = vpack.c.b16 %v1405, %v1401
    %v1642 = vpack.c.b16 %v1406, %v1402
    %v1643 = vpack.c.b16 %v1407, %v1403
    %v1644 = vpack.c.b16 %v1412, %v1408
    %v1645 = vpack.c.b16 %v1413, %v1409
    %v1646 = vpack.c.b16 %v1414, %v1410
    %v1647 = vpack.c.b16 %v1415, %v1411
    %v1648 = vpack.c.b16 %v1420, %v1416
    %v1649 = vpack.c.b16 %v1421, %v1417
    %v1650 = vpack.c.b16 %v1422, %v1418
    %v1651 = vpack.c.b16 %v1423, %v1419
    %v1652 = vpack.c.b16 %v1428, %v1424
    %v1653 = vpack.c.b16 %v1429, %v1425
    %v1654 = vpack.c.b16 %v1430, %v1426
    %v1655 = vpack.c.b16 %v1431, %v1427
    %v1656 = vpack.c.b16 %v1436, %v1432
    %v1657 = vpack.c.b16 %v1437, %v1433
    %v1658 = vpack.c.b16 %v1438, %v1434
    %v1659 = vpack.c.b16 %v1439, %v1435
    %v1660 = vpack.c.b16 %v1444, %v1440
    %v1661 = vpack.c.b16 %v1445, %v1441
    %v1662 = vpack.c.b16 %v1446, %v1442
    %v1663 = vpack.c.b16 %v1447, %v1443
    %v1664 = vpack.c.b16 %v1452, %v1448
    %v1665 = vpack.c.b16 %v1453, %v1449
    %v1666 = vpack.c.b16 %v1454, %v1450
    %v1667 = vpack.c.b16 %v1455, %v1451
    %v1668 = vpack.c.b16 %v1460, %v1456
    %v1669 = vpack.c.b16 %v1461, %v1457
    %v1670 = vpack.c.b16 %v1462, %v1458
    %v1671 = vpack.c.b16 %v1463, %v1459
    %v1672 = vpack.c.b16 %v1468, %v1464
    %v1673 = vpack.c.b16 %v1469, %v1465
    %v1674 = vpack.c.b16 %v1470, %v1466
    %v1675 = vpack.c.b16 %v1471, %v1467
    %v1676 = vpack.c.b16 %v1476, %v1472
    %v1677 = vpack.c.b16 %v1477, %v1473
    %v1678 = vpack.c.b16 %v1478, %v1474
    %v1679 = vpack.c.b16 %v1479, %v1475
    %v1680 = vpack.c.b16 %v1484, %v1480
    %v1681 = vpack.c.b16 %v1485, %v1481
    %v1682 = vpack.c.b16 %v1486, %v1482
    %v1683 = vpack.c.b16 %v1487, %v1483
    %v1684 = vpack.c.b16 %v1492, %v1488
    %v1685 = vpack.c.b16 %v1493, %v1489
    %v1686 = vpack.c.b16 %v1494, %v1490
    %v1687 = vpack.c.b16 %v1495, %v1491
    %v1688 = vpack.c.b16 %v1500, %v1496
    %v1689 = vpack.c.b16 %v1501, %v1497
    %v1690 = vpack.c.b16 %v1502, %v1498
    %v1691 = vpack.c.b16 %v1503, %v1499
    %v1692 = vpack.c.b16 %v1508, %v1504
    %v1693 = vpack.c.b16 %v1509, %v1505
    %v1694 = vpack.c.b16 %v1510, %v1506
    %v1695 = vpack.c.b16 %v1511, %v1507
    %v1696 = vpack.c.b16 %v1516, %v1512
    %v1697 = vpack.c.b16 %v1517, %v1513
    %v1698 = vpack.c.b16 %v1518, %v1514
    %v1699 = vpack.c.b16 %v1519, %v1515
    %v1700 = vpack.c.b16 %v1524, %v1520
    %v1701 = vpack.c.b16 %v1525, %v1521
    %v1702 = vpack.c.b16 %v1526, %v1522
    %v1703 = vpack.c.b16 %v1527, %v1523
    %v1704 = vpack.c.b16 %v1532, %v1528
    %v1705 = vpack.c.b16 %v1533, %v1529
    %v1706 = vpack.c.b16 %v1534, %v1530
    %v1707 = vpack.c.b16 %v1535, %v1531
    %v1708 = vpack.c.b16 %v1540, %v1536
    %v1709 = vpack.c.b16 %v1541, %v1537
    %v1710 = vpack.c.b16 %v1542, %v1538
    %v1711 = vpack.c.b16 %v1543, %v1539
    %v1712 = vpack.c.b16 %v1548, %v1544
    %v1713 = vpack.c.b16 %v1549, %v1545
    %v1714 = vpack.c.b16 %v1550, %v1546
    %v1715 = vpack.c.b16 %v1551, %v1547
    %v1716 = vpack.c.b16 %v1556, %v1552
    %v1717 = vpack.c.b16 %v1557, %v1553
    %v1718 = vpack.c.b16 %v1558, %v1554
    %v1719 = vpack.c.b16 %v1559, %v1555
    %v1720 = vpack.c.b16 %v1564, %v1560
    %v1721 = vpack.c.b16 %v1565, %v1561
    %v1722 = vpack.c.b16 %v1566, %v1562
    %v1723 = vpack.c.b16 %v1567, %v1563
    %v1724 = vpack.c.b16 %v1572, %v1568
    %v1725 = vpack.c.b16 %v1573, %v1569
    %v1726 = vpack.c.b16 %v1574, %v1570
    %v1727 = vpack.c.b16 %v1575, %v1571
    %v1728 = vpack.c.b16 %v1580, %v1576
    %v1729 = vpack.c.b16 %v1581, %v1577
    %v1730 = vpack.c.b16 %v1582, %v1578
    %v1731 = vpack.c.b16 %v1583, %v1579
    %v1732 = vpack.c.b16 %v1588, %v1584
    %v1733 = vpack.c.b16 %v1589, %v1585
    %v1734 = vpack.c.b16 %v1590, %v1586
    %v1735 = vpack.c.b16 %v1591, %v1587
    %v1736 = vpack.c.b16 %v1596, %v1592
    %v1737 = vpack.c.b16 %v1597, %v1593
    %v1738 = vpack.c.b16 %v1598, %v1594
    %v1739 = vpack.c.b16 %v1599, %v1595
    %v1740 = vpack.c.b16 %v1604, %v1600
    %v1741 = vpack.c.b16 %v1605, %v1601
    %v1742 = vpack.c.b16 %v1606, %v1602
    %v1743 = vpack.c.b16 %v1607, %v1603
    %v1744 = vpack.c.b16 %v1612, %v1608
    %v1745 = vpack.c.b16 %v1613, %v1609
    %v1746 = vpack.c.b16 %v1614, %v1610
    %v1747 = vpack.c.b16 %v1615, %v1611
    %v1748 = vpack.c.b16 %v1620, %v1616
    %v1749 = vpack.c.b16 %v1621, %v1617
    %v1750 = vpack.c.b16 %v1622, %v1618
    %v1751 = vpack.c.b16 %v1623, %v1619
    %1880 = vmatpush.bf16.msra.mxu0 %v1652
    %1881 = vmatpush.bf16.msra.mxu0 %v1648
    %1882 = vmatpush.bf16.msra.mxu0 %v1644
    %1883 = vmatpush.bf16.msra.mxu0 %v1640
    %1884 = vmatpush.bf16.msra.mxu0 %v1636
    %1885 = vmatpush.bf16.msra.mxu0 %v1632
    %1886 = vmatpush.bf16.msra.mxu0 %v1628
    %1887 = vmatpush.bf16.msra.mxu0 %v1624
    %1888 = vmatmul.bf16.gmra.mxu0 %v1108
    %v1889 = vpop.f32.mrf.mxu0
    %v1890 = vadd.f32 0.0, %v1889
    %v1891 = vpop.f32.mrf.mxu0
    %1892 = vdwg.mxu0
    %1893 = vmatpush.bf16.msra.mxu0 %v1684
    %1894 = vmatpush.bf16.msra.mxu0 %v1680
    %1895 = vmatpush.bf16.msra.mxu0 %v1676
    %1896 = vmatpush.bf16.msra.mxu0 %v1672
    %1897 = vmatpush.bf16.msra.mxu0 %v1668
    %1898 = vmatpush.bf16.msra.mxu0 %v1664
    %1899 = vmatpush.bf16.msra.mxu0 %v1660
    %1900 = vmatpush.bf16.msra.mxu0 %v1656
    %1901 = vmatmul.bf16.gmra.mxu0 %v1109
    %v1902 = vpop.f32.mrf.mxu0
    %v1903 = vadd.f32 %v1890, %v1902
    %v1904 = vpop.f32.mrf.mxu0
    %1905 = vdwg.mxu0
    %1906 = vmatpush.bf16.msra.mxu0 %v1716
    %1907 = vmatpush.bf16.msra.mxu0 %v1712
    %1908 = vmatpush.bf16.msra.mxu0 %v1708
    %1909 = vmatpush.bf16.msra.mxu0 %v1704
    %1910 = vmatpush.bf16.msra.mxu0 %v1700
    %1911 = vmatpush.bf16.msra.mxu0 %v1696
    %1912 = vmatpush.bf16.msra.mxu0 %v1692
    %1913 = vmatpush.bf16.msra.mxu0 %v1688
    %1914 = vmatmul.bf16.gmra.mxu0 %v1110
    %v1915 = vpop.f32.mrf.mxu0
    %v1916 = vadd.f32 %v1903, %v1915
    %v1917 = vpop.f32.mrf.mxu0
    %1918 = vdwg.mxu0
    %1919 = vmatpush.bf16.msra.mxu0 %v1748
    %1920 = vmatpush.bf16.msra.mxu0 %v1744
    %1921 = vmatpush.bf16.msra.mxu0 %v1740
    %1922 = vmatpush.bf16.msra.mxu0 %v1736
    %1923 = vmatpush.bf16.msra.mxu0 %v1732
    %1924 = vmatpush.bf16.msra.mxu0 %v1728
    %1925 = vmatpush.bf16.msra.mxu0 %v1724
    %1926 = vmatpush.bf16.msra.mxu0 %v1720
    %1927 = vmatmul.bf16.gmra.mxu0 %v1111
    %v1928 = vpop.f32.mrf.mxu0
    %v1929 = vadd.f32 %v1916, %v1928
    %v1930 = vpop.f32.mrf.mxu0
    %1931 = vdwg.mxu0
    %1932 = vmatpush.bf16.msra.mxu0 %v1653
    %1933 = vmatpush.bf16.msra.mxu0 %v1649
    %1934 = vmatpush.bf16.msra.mxu0 %v1645
    %1935 = vmatpush.bf16.msra.mxu0 %v1641
    %1936 = vmatpush.bf16.msra.mxu0 %v1637
    %1937 = vmatpush.bf16.msra.mxu0 %v1633
    %1938 = vmatpush.bf16.msra.mxu0 %v1629
    %1939 = vmatpush.bf16.msra.mxu0 %v1625
    %1940 = vmatmul.bf16.gmra.mxu0 %v1108
    %v1941 = vpop.f32.mrf.mxu0
    %v1942 = vadd.f32 0.0, %v1941
    %v1943 = vpop.f32.mrf.mxu0
    %1944 = vdwg.mxu0
    %1945 = vmatpush.bf16.msra.mxu0 %v1685
    %1946 = vmatpush.bf16.msra.mxu0 %v1681
    %1947 = vmatpush.bf16.msra.mxu0 %v1677
    %1948 = vmatpush.bf16.msra.mxu0 %v1673
    %1949 = vmatpush.bf16.msra.mxu0 %v1669
    %1950 = vmatpush.bf16.msra.mxu0 %v1665
    %1951 = vmatpush.bf16.msra.mxu0 %v1661
    %1952 = vmatpush.bf16.msra.mxu0 %v1657
    %1953 = vmatmul.bf16.gmra.mxu0 %v1109
    %v1954 = vpop.f32.mrf.mxu0
    %v1955 = vadd.f32 %v1942, %v1954
    %v1956 = vpop.f32.mrf.mxu0
    %1957 = vdwg.mxu0
    %1958 = vmatpush.bf16.msra.mxu0 %v1717
    %1959 = vmatpush.bf16.msra.mxu0 %v1713
    %1960 = vmatpush.bf16.msra.mxu0 %v1709
    %1961 = vmatpush.bf16.msra.mxu0 %v1705
    %1962 = vmatpush.bf16.msra.mxu0 %v1701
    %1963 = vmatpush.bf16.msra.mxu0 %v1697
    %1964 = vmatpush.bf16.msra.mxu0 %v1693
    %1965 = vmatpush.bf16.msra.mxu0 %v1689
    %1966 = vmatmul.bf16.gmra.mxu0 %v1110
    %v1967 = vpop.f32.mrf.mxu0
    %v1968 = vadd.f32 %v1955, %v1967
    %v1969 = vpop.f32.mrf.mxu0
    %1970 = vdwg.mxu0
    %1971 = vmatpush.bf16.msra.mxu0 %v1749
    %1972 = vmatpush.bf16.msra.mxu0 %v1745
    %1973 = vmatpush.bf16.msra.mxu0 %v1741
    %1974 = vmatpush.bf16.msra.mxu0 %v1737
    %1975 = vmatpush.bf16.msra.mxu0 %v1733
    %1976 = vmatpush.bf16.msra.mxu0 %v1729
    %1977 = vmatpush.bf16.msra.mxu0 %v1725
    %1978 = vmatpush.bf16.msra.mxu0 %v1721
    %1979 = vmatmul.bf16.gmra.mxu0 %v1111
    %v1980 = vpop.f32.mrf.mxu0
    %v1981 = vadd.f32 %v1968, %v1980
    %v1982 = vpop.f32.mrf.mxu0
    %1983 = vdwg.mxu0
    %1984 = vmatpush.bf16.msra.mxu0 %v1654
    %1985 = vmatpush.bf16.msra.mxu0 %v1650
    %1986 = vmatpush.bf16.msra.mxu0 %v1646
    %1987 = vmatpush.bf16.msra.mxu0 %v1642
    %1988 = vmatpush.bf16.msra.mxu0 %v1638
    %1989 = vmatpush.bf16.msra.mxu0 %v1634
    %1990 = vmatpush.bf16.msra.mxu0 %v1630
    %1991 = vmatpush.bf16.msra.mxu0 %v1626
    %1992 = vmatmul.bf16.gmra.mxu0 %v1108
    %v1993 = vpop.f32.mrf.mxu0
    %v1994 = vadd.f32 0.0, %v1993
    %v1995 = vpop.f32.mrf.mxu0
    %1996 = vdwg.mxu0
    %1997 = vmatpush.bf16.msra.mxu0 %v1686
    %1998 = vmatpush.bf16.msra.mxu0 %v1682
    %1999 = vmatpush.bf16.msra.mxu0 %v1678
    %2000 = vmatpush.bf16.msra.mxu0 %v1674
    %2001 = vmatpush.bf16.msra.mxu0 %v1670
    %2002 = vmatpush.bf16.msra.mxu0 %v1666
    %2003 = vmatpush.bf16.msra.mxu0 %v1662
    %2004 = vmatpush.bf16.msra.mxu0 %v1658
    %2005 = vmatmul.bf16.gmra.mxu0 %v1109
    %v2006 = vpop.f32.mrf.mxu0
    %v2007 = vadd.f32 %v1994, %v2006
    %v2008 = vpop.f32.mrf.mxu0
    %2009 = vdwg.mxu0
    %2010 = vmatpush.bf16.msra.mxu0 %v1718
    %2011 = vmatpush.bf16.msra.mxu0 %v1714
    %2012 = vmatpush.bf16.msra.mxu0 %v1710
    %2013 = vmatpush.bf16.msra.mxu0 %v1706
    %2014 = vmatpush.bf16.msra.mxu0 %v1702
    %2015 = vmatpush.bf16.msra.mxu0 %v1698
    %2016 = vmatpush.bf16.msra.mxu0 %v1694
    %2017 = vmatpush.bf16.msra.mxu0 %v1690
    %2018 = vmatmul.bf16.gmra.mxu0 %v1110
    %v2019 = vpop.f32.mrf.mxu0
    %v2020 = vadd.f32 %v2007, %v2019
    %v2021 = vpop.f32.mrf.mxu0
    %2022 = vdwg.mxu0
    %2023 = vmatpush.bf16.msra.mxu0 %v1750
    %2024 = vmatpush.bf16.msra.mxu0 %v1746
    %2025 = vmatpush.bf16.msra.mxu0 %v1742
    %2026 = vmatpush.bf16.msra.mxu0 %v1738
    %2027 = vmatpush.bf16.msra.mxu0 %v1734
    %2028 = vmatpush.bf16.msra.mxu0 %v1730
    %2029 = vmatpush.bf16.msra.mxu0 %v1726
    %2030 = vmatpush.bf16.msra.mxu0 %v1722
    %2031 = vmatmul.bf16.gmra.mxu0 %v1111
    %v2032 = vpop.f32.mrf.mxu0
    %v2033 = vadd.f32 %v2020, %v2032
    %v2034 = vpop.f32.mrf.mxu0
    %2035 = vdwg.mxu0
    %2036 = vmatpush.bf16.msra.mxu0 %v1655
    %2037 = vmatpush.bf16.msra.mxu0 %v1651
    %2038 = vmatpush.bf16.msra.mxu0 %v1647
    %2039 = vmatpush.bf16.msra.mxu0 %v1643
    %2040 = vmatpush.bf16.msra.mxu0 %v1639
    %2041 = vmatpush.bf16.msra.mxu0 %v1635
    %2042 = vmatpush.bf16.msra.mxu0 %v1631
    %2043 = vmatpush.bf16.msra.mxu0 %v1627
    %2044 = vmatmul.bf16.gmra.mxu0 %v1108
    %v2045 = vpop.f32.mrf.mxu0
    %v2046 = vadd.f32 0.0, %v2045
    %v2047 = vpop.f32.mrf.mxu0
    %2048 = vdwg.mxu0
    %2049 = vmatpush.bf16.msra.mxu0 %v1687
    %2050 = vmatpush.bf16.msra.mxu0 %v1683
    %2051 = vmatpush.bf16.msra.mxu0 %v1679
    %2052 = vmatpush.bf16.msra.mxu0 %v1675
    %2053 = vmatpush.bf16.msra.mxu0 %v1671
    %2054 = vmatpush.bf16.msra.mxu0 %v1667
    %2055 = vmatpush.bf16.msra.mxu0 %v1663
    %2056 = vmatpush.bf16.msra.mxu0 %v1659
    %2057 = vmatmul.bf16.gmra.mxu0 %v1109
    %v2058 = vpop.f32.mrf.mxu0
    %v2059 = vadd.f32 %v2046, %v2058
    %v2060 = vpop.f32.mrf.mxu0
    %2061 = vdwg.mxu0
    %2062 = vmatpush.bf16.msra.mxu0 %v1719
    %2063 = vmatpush.bf16.msra.mxu0 %v1715
    %2064 = vmatpush.bf16.msra.mxu0 %v1711
    %2065 = vmatpush.bf16.msra.mxu0 %v1707
    %2066 = vmatpush.bf16.msra.mxu0 %v1703
    %2067 = vmatpush.bf16.msra.mxu0 %v1699
    %2068 = vmatpush.bf16.msra.mxu0 %v1695
    %2069 = vmatpush.bf16.msra.mxu0 %v1691
    %2070 = vmatmul.bf16.gmra.mxu0 %v1110
    %v2071 = vpop.f32.mrf.mxu0
    %v2072 = vadd.f32 %v2059, %v2071
    %v2073 = vpop.f32.mrf.mxu0
    %2074 = vdwg.mxu0
    %2075 = vmatpush.bf16.msra.mxu0 %v1751
    %2076 = vmatpush.bf16.msra.mxu0 %v1747
    %2077 = vmatpush.bf16.msra.mxu0 %v1743
    %2078 = vmatpush.bf16.msra.mxu0 %v1739
    %2079 = vmatpush.bf16.msra.mxu0 %v1735
    %2080 = vmatpush.bf16.msra.mxu0 %v1731
    %2081 = vmatpush.bf16.msra.mxu0 %v1727
    %2082 = vmatpush.bf16.msra.mxu0 %v1723
    %2083 = vmatmul.bf16.gmra.mxu0 %v1111
    %v2084 = vpop.f32.mrf.mxu0
    %v2085 = vadd.f32 %v2072, %v2084
    %v2086 = vpop.f32.mrf.mxu0
    %2087 = vdwg.mxu0
    %v2088 = vrsqrt.pop %v1929
    %v2089 = vmul.f32 %v2088, %v1929
    %v2090 = vmul.f32 %v2089, %v2088
    %v2091 = vmul.f32 0.5, %v2090
    %v2092 = vsub.f32 1.5, %v2091
    %v2093 = vmul.f32 %v2088, %v2092
    %v2094 = vmul.f32 %v1929, %v2093
    %vm2095 = vcmp.eq.f32.partialorder %v1929, inf
    %v2096 = vsel %vm2095, %v1929, %v2094
    %vm2097 = vcmp.eq.f32.partialorder %v1929, 0.0
    %v2098 = vand.u32 %v1929, 2147483648
    %v2099 = vsel %vm2097, %v2098, %v2096
    %v2100 = vrsqrt.pop %v1981
    %v2101 = vmul.f32 %v2100, %v1981
    %v2102 = vmul.f32 %v2101, %v2100
    %v2103 = vmul.f32 0.5, %v2102
    %v2104 = vsub.f32 1.5, %v2103
    %v2105 = vmul.f32 %v2100, %v2104
    %v2106 = vmul.f32 %v1981, %v2105
    %vm2107 = vcmp.eq.f32.partialorder %v1981, inf
    %v2108 = vsel %vm2107, %v1981, %v2106
    %vm2109 = vcmp.eq.f32.partialorder %v1981, 0.0
    %v2110 = vand.u32 %v1981, 2147483648
    %v2111 = vsel %vm2109, %v2110, %v2108
    %v2112 = vrsqrt.pop %v2033
    %v2113 = vmul.f32 %v2112, %v2033
    %v2114 = vmul.f32 %v2113, %v2112
    %v2115 = vmul.f32 0.5, %v2114
    %v2116 = vsub.f32 1.5, %v2115
    %v2117 = vmul.f32 %v2112, %v2116
    %v2118 = vmul.f32 %v2033, %v2117
    %vm2119 = vcmp.eq.f32.partialorder %v2033, inf
    %v2120 = vsel %vm2119, %v2033, %v2118
    %vm2121 = vcmp.eq.f32.partialorder %v2033, 0.0
    %v2122 = vand.u32 %v2033, 2147483648
    %v2123 = vsel %vm2121, %v2122, %v2120
    %v2124 = vrsqrt.pop %v2085
    %v2125 = vmul.f32 %v2124, %v2085
    %v2126 = vmul.f32 %v2125, %v2124
    %v2127 = vmul.f32 0.5, %v2126
    %v2128 = vsub.f32 1.5, %v2127
    %v2129 = vmul.f32 %v2124, %v2128
    %v2130 = vmul.f32 %v2085, %v2129
    %vm2131 = vcmp.eq.f32.partialorder %v2085, inf
    %v2132 = vsel %vm2131, %v2085, %v2130
    %vm2133 = vcmp.eq.f32.partialorder %v2085, 0.0
    %v2134 = vand.u32 %v2085, 2147483648
    %v2135 = vsel %vm2133, %v2134, %v2132
    %v2136 = vmul.f32 %v2099, 0.044676706
    %v2137 = vmul.f32 %v2111, 0.044676706
    %v2138 = vmul.f32 %v2123, 0.044676706
    %v2139 = vmul.f32 %v2135, 0.044676706
    %v2140 = vadd.f32 %v2136, 1e-05
    %v2141 = vadd.f32 %v2137, 1e-05
    %v2142 = vadd.f32 %v2138, 1e-05
    %v2143 = vadd.f32 %v2139, 1e-05
    %v2144 = vrcp.pop %v2140
    %v2145 = vmul.f32 %v2140, %v2144
    %v2146 = vsub.f32 1.0, %v2145
    %v2147 = vmul.f32 %v2144, %v2146
    %v2148 = vadd.f32 %v2144, %v2147
    %vm2149 = vweird.f32 %v2140
    %vm2150 = vweird.f32 %v2144
    %vm2151 = vmor %vm2149, %vm2150
    %v2152 = vsel %vm2151, %v2144, %v2148
    %v2153 = vand.u32 2147483647, %v2140
    %vm2154 = vcmp.eq.f32.partialorder %v2153, 8.507059e+37
    %v2155 = vand.u32 %v2140, 2147483648
    %v2156 = vor.u32 1.1754944e-38, %v2155
    %v2157 = vsel %vm2154, %v2156, %v2152
    %v2158 = vmul.f32 %v1100, %v2157
    %v2159 = vrcp.pop %v2141
    %v2160 = vmul.f32 %v2141, %v2159
    %v2161 = vsub.f32 1.0, %v2160
    %v2162 = vmul.f32 %v2159, %v2161
    %v2163 = vadd.f32 %v2159, %v2162
    %vm2164 = vweird.f32 %v2141
    %vm2165 = vweird.f32 %v2159
    %vm2166 = vmor %vm2164, %vm2165
    %v2167 = vsel %vm2166, %v2159, %v2163
    %v2168 = vand.u32 2147483647, %v2141
    %vm2169 = vcmp.eq.f32.partialorder %v2168, 8.507059e+37
    %v2170 = vand.u32 %v2141, 2147483648
    %v2171 = vor.u32 1.1754944e-38, %v2170
    %v2172 = vsel %vm2169, %v2171, %v2167
    %v2173 = vmul.f32 %v1101, %v2172
    %v2174 = vrcp.pop %v2142
    %v2175 = vmul.f32 %v2142, %v2174
    %v2176 = vsub.f32 1.0, %v2175
    %v2177 = vmul.f32 %v2174, %v2176
    %v2178 = vadd.f32 %v2174, %v2177
    %vm2179 = vweird.f32 %v2142
    %vm2180 = vweird.f32 %v2174
    %vm2181 = vmor %vm2179, %vm2180
    %v2182 = vsel %vm2181, %v2174, %v2178
    %v2183 = vand.u32 2147483647, %v2142
    %vm2184 = vcmp.eq.f32.partialorder %v2183, 8.507059e+37
    %v2185 = vand.u32 %v2142, 2147483648
    %v2186 = vor.u32 1.1754944e-38, %v2185
    %v2187 = vsel %vm2184, %v2186, %v2182
    %v2188 = vmul.f32 %v1102, %v2187
    %v2189 = vrcp.pop %v2143
    %v2190 = vmul.f32 %v2143, %v2189
    %v2191 = vsub.f32 1.0, %v2190
    %v2192 = vmul.f32 %v2189, %v2191
    %v2193 = vadd.f32 %v2189, %v2192
    %vm2194 = vweird.f32 %v2143
    %vm2195 = vweird.f32 %v2189
    %vm2196 = vmor %vm2194, %vm2195
    %v2197 = vsel %vm2196, %v2189, %v2193
    %v2198 = vand.u32 2147483647, %v2143
    %vm2199 = vcmp.eq.f32.partialorder %v2198, 8.507059e+37
    %v2200 = vand.u32 %v2143, 2147483648
    %v2201 = vor.u32 1.1754944e-38, %v2200
    %v2202 = vsel %vm2199, %v2201, %v2197
    %v2203 = vmul.f32 %v1103, %v2202
    %2204 = vst [vmem:[#allocation8] sm:$0xff] %v2158
    %2205 = vst [vmem:[#allocation8 + $0x8] sm:$0xff] %v2173
    %2206 = vst [vmem:[#allocation8 + $0x10] sm:$0xff] %v2188
    %2207 = vst [vmem:[#allocation8 + $0x18] sm:$0xff] %v2203
    // Predicated region
    $region26: #{tpu_custom_call.1} parent=1 // pred_check
      _
    $region27: #{tpu_custom_call.1} parent=1 // pred_check_branch
      %2209 = sbr.rel (0) target = $region29
    $region28: #{tpu_custom_call.1} parent=1 // pred_region
      %2211 = vsyncadd [#allocation4], 0
      %s2213 = sshll.u32 [#allocation8], 4
      %s2214 = int_to_ptr.vmem [resolvable:$true] %s2213
      %s2215 = sshll.u32 %s3, 4
      %s2216 = int_to_ptr.hbm [resolvable:$true] %s2215
      %2218 = dma.vmem_to_hbm [thread:$0]  %s2214, 512, %s2216, [#allocation4]
    $region29: #{tpu_custom_call.1} parent=1 // pred_fallthru
      _
    // Predicated region
    $region30: #{tpu_custom_call.1} parent=1 // pred_check
      _
    $region31: #{tpu_custom_call.1} parent=1 // pred_check_branch
      %2220 = sbr.rel (0) target = $region33
    $region32: #{tpu_custom_call.1} parent=1 // pred_region
      %2222 = dma.done [#allocation4], 512
    $region33: #{tpu_custom_call.1} parent=1 // pred_fallthru
      _
    %2223 = vsyncpa [#allocation3], 1
    %2224 = vsyncpa [#allocation6], 1
    %2225 = vsyncpa [#allocation4], 1

</llo_original>
